<compile_context>
chip_gen: v6e
topology: v6e:2x2x1
jax: 0.10.0
libtpu: 0.0.40
codegen_flags: <defaults>
</compile_context>

<pallas_src>
import jax
import jax.numpy as jnp
from jax import lax
from jax.experimental import pallas as pl
from jax.experimental.pallas import tpu as pltpu


def pfd_kernel(x_ref, w1_ref, w2_ref, w3_ref, w4_ref, fw_ref, w6_ref, w7_ref,
               w8_ref, bias_ref, out_ref):
    rows = x_ref.shape[0]          # BB * N
    bb = out_ref.shape[-1]         # BB (batch elements handled this step)
    n = rows // bb                 # points per element

    # Packed per-channel biases (BN already folded): one (8,256) f32 slab.
    b1 = bias_ref[0:1, 0:64]
    b2 = bias_ref[1:2, 0:64]
    b3 = bias_ref[2:3, 0:128]
    b4 = bias_ref[3:4, 0:256]
    b5 = bias_ref[4:5, 0:256]
    b6 = bias_ref[5:6, 0:128]
    b7 = bias_ref[6:7, 0:16]
    b8 = bias_ref[7:8, 0:1]

    def mm(a, w):  # bf16 MXU matmul, f32 accumulate
        return jnp.dot(a.astype(jnp.bfloat16), w,
                       preferred_element_type=jnp.float32)

    pts = x_ref[...]                                            # [BB*N, 3] f32

    # conv1 (1x3) + folded BN + ReLU on the VPU (K=3 is too small for the MXU).
    w1 = w1_ref[...]                                            # [3, 64] f32
    h1 = jnp.maximum(pts[:, 0:1] * w1[0:1, :]
                     + pts[:, 1:2] * w1[1:2, :]
                     + pts[:, 2:3] * w1[2:3, :] + b1, 0.0)      # [BB*N, 64]

    # conv2..conv4 (1x1) + folded BN + ReLU as plain matmuls.
    h64 = jnp.maximum(mm(h1, w2_ref[...]) + b2, 0.0)            # [BB*N, 64]
    h128 = jnp.maximum(mm(h64, w3_ref[...]) + b3, 0.0)          # [BB*N, 128]
    h256 = jnp.maximum(mm(h128, w4_ref[...]) + b4, 0.0)         # [BB*N, 256]

    # MaxPool2d((crop_point_num, 1)) == per-element max over the point axis.
    p64 = jnp.max(h64.reshape(bb, n, 64), axis=1)               # [BB, 64]
    p128 = jnp.max(h128.reshape(bb, n, 128), axis=1)            # [BB, 128]
    p256 = jnp.max(h256.reshape(bb, n, 256), axis=1)            # [BB, 256]

    # fc1 (448->256) on concat([x_256, x_128, x_64]) as split-weight matmuls.
    z1 = (mm(p256, fw_ref[0:256, :])
          + mm(p128, fw_ref[256:384, :])
          + mm(p64, fw_ref[384:448, :]))                        # [BB, 256]
    g1 = jnp.maximum(z1 + b5, 0.0)                              # [BB, 256]
    g2 = jnp.maximum(mm(g1, w6_ref[...]) + b6, 0.0)             # [BB, 128]
    g3 = jnp.maximum(mm(g2, w7_ref[...]) + b7, 0.0)             # [BB, 16]

    # fc4 (16->1) as w8 @ g3^T so the per-step output row is lane-dense [1, BB].
    out_row = lax.dot_general(
        w8_ref[...], g3.astype(jnp.bfloat16),
        dimension_numbers=(((1,), (1,)), ((), ())),
        preferred_element_type=jnp.float32)                     # [1, BB]
    out_ref[...] = (out_row + b8).reshape(1, 1, bb)


def _full_spec(arr):
    nd = arr.ndim
    return pl.BlockSpec(arr.shape, lambda g, _nd=nd: (0,) * _nd)


def _pick_block_batch(B, N, max_rows=4096):
    # Largest BB s.t. BB*N fits comfortably in VMEM on every generation (incl.
    # v7x's 64 MiB), BB divides B, and there are >= 2 grid steps when B >= 2
    # (so both v7x TensorCores get work).
    cap = max(1, max_rows // max(N, 1))
    if B >= 2:
        cap = min(cap, B // 2)
    bb = max(1, min(B, cap))
    while B % bb:
        bb -= 1
    return bb


@jax.jit
def pfdnet_forward(x, params):
    # x: [B, 1, N, 3]  (PyTorch NCHW; 1 input channel, N = crop_point_num)
    B, _, N, _ = x.shape
    assert N % 8 == 0, "crop_point_num must be a multiple of 8"
    BB = _pick_block_batch(B, N)
    G = B // BB

    pts = x[:, 0, :, :].astype(jnp.float32).reshape(B * N, 3)   # [B*N, 3]

    in_specs = [pl.BlockSpec((BB * N, 3), lambda g: (g, 0))]
    in_specs += [_full_spec(p) for p in params]

    flops = (2 * B * N * (3 * 64 + 64 * 64 + 64 * 128 + 128 * 256)
             + 2 * B * (448 * 256 + 256 * 128 + 128 * 16 + 16))
    bytes_accessed = int(pts.size * 4 + B * 4
                         + sum(int(p.size) * p.dtype.itemsize for p in params))

    out = pl.pallas_call(
        pfd_kernel,
        out_shape=jax.ShapeDtypeStruct((G, 1, BB), jnp.float32),
        grid_spec=pltpu.PrefetchScalarGridSpec(
            num_scalar_prefetch=0,
            grid=(G,),
            in_specs=in_specs,
            out_specs=pl.BlockSpec((1, 1, BB), lambda g: (g, 0, 0)),
        ),
        compiler_params=pltpu.CompilerParams(
            dimension_semantics=("parallel",),
            vmem_limit_bytes=32 * 1024 * 1024),
        cost_estimate=pl.CostEstimate(
            flops=flops, transcendentals=0, bytes_accessed=bytes_accessed),
    )(pts, *params)
    return out.reshape(B, 1)                                    # [B, 1]


def make_params(key):
    keys = iter(jax.random.split(key, 64))

    def rnd(shape, scale=0.1):
        return scale * jax.random.normal(next(keys), shape, dtype=jnp.float32)

    def bn_params(c):
        gamma = 1.0 + 0.1 * jax.random.normal(next(keys), (c,), dtype=jnp.float32)
        beta = rnd((c,))
        mean = rnd((c,))
        var = 1.0 + 0.1 * jax.random.uniform(next(keys), (c,), dtype=jnp.float32)
        return gamma, beta, mean, var

    def fold(w, layer_bias, bn, eps=1e-5):
        # y = relu(((x@w + cb) - mean)/sqrt(var+eps)*gamma + beta)
        #   = relu(x @ (w*scale) + (beta + scale*(cb - mean)))
        gamma, beta, mean, var = bn
        scale = gamma / jnp.sqrt(var + eps)
        return w * scale[None, :], beta + scale * (layer_bias - mean)

    # conv / fc weights stored as [Cin, Cout]; BN scale folded into columns.
    w1, b1 = fold(rnd((3, 64)), rnd((64,)), bn_params(64))        # conv1 + bn1
    w2, b2 = fold(rnd((64, 64)), rnd((64,)), bn_params(64))       # conv2 + bn2
    w3, b3 = fold(rnd((64, 128)), rnd((128,)), bn_params(128))    # conv3 + bn3
    w4, b4 = fold(rnd((128, 256)), rnd((256,)), bn_params(256))   # conv4 + bn4
    fw1, b5 = fold(rnd((448, 256)), rnd((256,)), bn_params(256))  # fc1 + bn_1
    w6, b6 = fold(rnd((256, 128)), rnd((128,)), bn_params(128))   # fc2 + bn_2
    w7, b7 = fold(rnd((128, 16)), rnd((16,)), bn_params(16))      # fc3 + bn_3
    w8 = rnd((16, 1))                                             # fc4
    fb4 = rnd((1,))

    # Pack all per-channel biases into a single (8, 256) f32 slab (one DMA).
    biases = jnp.zeros((8, 256), jnp.float32)
    biases = biases.at[0, :64].set(b1).at[1, :64].set(b2)
    biases = biases.at[2, :128].set(b3).at[3, :256].set(b4)
    biases = biases.at[4, :256].set(b5).at[5, :128].set(b6)
    biases = biases.at[6, :16].set(b7).at[7, 0].set(fb4[0])

    bf = jnp.bfloat16
    return (w1,                                        # [3, 64]  f32 (VPU conv1)
            w2.astype(bf), w3.astype(bf), w4.astype(bf),
            fw1.astype(bf), w6.astype(bf), w7.astype(bf),
            w8.T.astype(bf),                           # [1, 16]
            biases)                                    # [8, 256] f32


def ref_forward(x, params):
    # Plain-JAX reference mirroring the kernel's precision (bf16 matmul operands,
    # f32 accumulation / element-wise math).
    w1, w2, w3, w4, fw1, w6, w7, w8t, biases = params
    b1 = biases[0, :64]
    b2 = biases[1, :64]
    b3 = biases[2, :128]
    b4 = biases[3, :256]
    b5 = biases[4, :256]
    b6 = biases[5, :128]
    b7 = biases[6, :16]
    b8 = biases[7, 0]
    relu = lambda z: jnp.maximum(z, 0.0)
    mm = lambda a, w: jnp.dot(a.astype(jnp.bfloat16), w,
                              preferred_element_type=jnp.float32)

    pts = x[:, 0].astype(jnp.float32)                       # [B, N, 3]
    h1 = relu(jnp.einsum('bnk,kc->bnc', pts, w1) + b1)      # [B, N, 64]
    h64 = relu(mm(h1, w2) + b2)                             # [B, N, 64]
    h128 = relu(mm(h64, w3) + b3)                           # [B, N, 128]
    h256 = relu(mm(h128, w4) + b4)                          # [B, N, 256]
    p64 = h64.max(axis=1)
    p128 = h128.max(axis=1)
    p256 = h256.max(axis=1)
    z1 = mm(p256, fw1[:256]) + mm(p128, fw1[256:384]) + mm(p64, fw1[384:448])
    g1 = relu(z1 + b5)
    g2 = relu(mm(g1, w6) + b6)
    g3 = relu(mm(g2, w7) + b7)
    return mm(g3, w8t.T) + b8                               # [B, 1]


if __name__ == "__main__":
    B, N = 4, 128                      # N == crop_point_num
    key = jax.random.PRNGKey(0)
    kx, kp = jax.random.split(key)
    x = jax.random.normal(kx, (B, 1, N, 3), dtype=jnp.float32)   # NCHW like PyTorch
    params = make_params(kp)

    out = pfdnet_forward(x, params)
    out = jax.block_until_ready(out)

    ref = ref_forward(x, params)
    assert out.shape == (B, 1), out.shape
    assert jnp.allclose(out, ref, atol=1e-2, rtol=1e-2), (out, ref)
    print("KERNEL_OK")
</pallas_src>

<mosaic_0001>
module attributes {stable_mosaic.version = 11 : i64} {
  func.func @pfd_kernel(%arg0: i32, %arg1: memref<256x3xf32, #tpu.memory_space<vmem>>, %arg2: memref<3x64xf32, #tpu.memory_space<vmem>>, %arg3: memref<64x64xbf16, #tpu.memory_space<vmem>>, %arg4: memref<64x128xbf16, #tpu.memory_space<vmem>>, %arg5: memref<128x256xbf16, #tpu.memory_space<vmem>>, %arg6: memref<448x256xbf16, #tpu.memory_space<vmem>>, %arg7: memref<256x128xbf16, #tpu.memory_space<vmem>>, %arg8: memref<128x16xbf16, #tpu.memory_space<vmem>>, %arg9: memref<1x16xbf16, #tpu.memory_space<vmem>>, %arg10: memref<8x256xf32, #tpu.memory_space<vmem>>, %arg11: memref<1x1x2xf32, #tpu.memory_space<vmem>>) attributes {dimension_semantics = [#tpu.dimension_semantics<parallel>], iteration_bounds = array<i64: 2>, scalar_prefetch = 0 : i64, scratch_operands = 0 : i64, tpu.core_type = #tpu.core_type<tc>, window_params = [{transform_indices = @transform_0, window_bounds = array<i64: 256, 3>}, {pipeline_mode = #tpu.pipeline_mode<synchronous>, transform_indices = @transform_1, window_bounds = array<i64: 3, 64>}, {pipeline_mode = #tpu.pipeline_mode<synchronous>, transform_indices = @transform_2, window_bounds = array<i64: 64, 64>}, {pipeline_mode = #tpu.pipeline_mode<synchronous>, transform_indices = @transform_3, window_bounds = array<i64: 64, 128>}, {pipeline_mode = #tpu.pipeline_mode<synchronous>, transform_indices = @transform_4, window_bounds = array<i64: 128, 256>}, {pipeline_mode = #tpu.pipeline_mode<synchronous>, transform_indices = @transform_5, window_bounds = array<i64: 448, 256>}, {pipeline_mode = #tpu.pipeline_mode<synchronous>, transform_indices = @transform_6, window_bounds = array<i64: 256, 128>}, {pipeline_mode = #tpu.pipeline_mode<synchronous>, transform_indices = @transform_7, window_bounds = array<i64: 128, 16>}, {pipeline_mode = #tpu.pipeline_mode<synchronous>, transform_indices = @transform_8, window_bounds = array<i64: 1, 16>}, {pipeline_mode = #tpu.pipeline_mode<synchronous>, transform_indices = @transform_9, window_bounds = array<i64: 8, 256>}, {transform_indices = @transform_10, window_bounds = array<i64: 1, 1, 2>}]} {
    %c0 = arith.constant 0 : index
    %c0_0 = arith.constant 0 : index
    %0 = vector.load %arg10[%c0, %c0_0] : memref<8x256xf32, #tpu.memory_space<vmem>>, vector<1x64xf32>
    %c1 = arith.constant 1 : index
    %c0_1 = arith.constant 0 : index
    %1 = vector.load %arg10[%c1, %c0_1] : memref<8x256xf32, #tpu.memory_space<vmem>>, vector<1x64xf32>
    %c2 = arith.constant 2 : index
    %c0_2 = arith.constant 0 : index
    %2 = vector.load %arg10[%c2, %c0_2] : memref<8x256xf32, #tpu.memory_space<vmem>>, vector<1x128xf32>
    %c3 = arith.constant 3 : index
    %c0_3 = arith.constant 0 : index
    %3 = vector.load %arg10[%c3, %c0_3] : memref<8x256xf32, #tpu.memory_space<vmem>>, vector<1x256xf32>
    %c4 = arith.constant 4 : index
    %c0_4 = arith.constant 0 : index
    %4 = vector.load %arg10[%c4, %c0_4] : memref<8x256xf32, #tpu.memory_space<vmem>>, vector<1x256xf32>
    %c5 = arith.constant 5 : index
    %c0_5 = arith.constant 0 : index
    %5 = vector.load %arg10[%c5, %c0_5] : memref<8x256xf32, #tpu.memory_space<vmem>>, vector<1x128xf32>
    %c6 = arith.constant 6 : index
    %c0_6 = arith.constant 0 : index
    %6 = vector.load %arg10[%c6, %c0_6] : memref<8x256xf32, #tpu.memory_space<vmem>>, vector<1x16xf32>
    %c7 = arith.constant 7 : index
    %c0_7 = arith.constant 0 : index
    %7 = vector.load %arg10[%c7, %c0_7] : memref<8x256xf32, #tpu.memory_space<vmem>>, vector<1x1xf32>
    %c0_8 = arith.constant 0 : index
    %c0_9 = arith.constant 0 : index
    %8 = vector.load %arg1[%c0_8, %c0_9] : memref<256x3xf32, #tpu.memory_space<vmem>>, vector<256x3xf32>
    %c0_10 = arith.constant 0 : index
    %c0_11 = arith.constant 0 : index
    %9 = vector.load %arg2[%c0_10, %c0_11] : memref<3x64xf32, #tpu.memory_space<vmem>>, vector<3x64xf32>
    %10 = vector.extract_strided_slice %8 {offsets = [0, 0], sizes = [256, 1], strides = [1, 1]} : vector<256x3xf32> to vector<256x1xf32>
    %11 = vector.extract_strided_slice %9 {offsets = [0, 0], sizes = [1, 64], strides = [1, 1]} : vector<3x64xf32> to vector<1x64xf32>
    %12 = vector.broadcast %10 : vector<256x1xf32> to vector<256x64xf32>
    %13 = vector.broadcast %11 : vector<1x64xf32> to vector<256x64xf32>
    %14 = arith.mulf %12, %13 : vector<256x64xf32>
    %15 = vector.extract_strided_slice %8 {offsets = [0, 1], sizes = [256, 1], strides = [1, 1]} : vector<256x3xf32> to vector<256x1xf32>
    %16 = vector.extract_strided_slice %9 {offsets = [1, 0], sizes = [1, 64], strides = [1, 1]} : vector<3x64xf32> to vector<1x64xf32>
    %17 = vector.broadcast %15 : vector<256x1xf32> to vector<256x64xf32>
    %18 = vector.broadcast %16 : vector<1x64xf32> to vector<256x64xf32>
    %19 = arith.mulf %17, %18 : vector<256x64xf32>
    %20 = arith.addf %14, %19 : vector<256x64xf32>
    %21 = vector.extract_strided_slice %8 {offsets = [0, 2], sizes = [256, 1], strides = [1, 1]} : vector<256x3xf32> to vector<256x1xf32>
    %22 = vector.extract_strided_slice %9 {offsets = [2, 0], sizes = [1, 64], strides = [1, 1]} : vector<3x64xf32> to vector<1x64xf32>
    %23 = vector.broadcast %21 : vector<256x1xf32> to vector<256x64xf32>
    %24 = vector.broadcast %22 : vector<1x64xf32> to vector<256x64xf32>
    %25 = arith.mulf %23, %24 : vector<256x64xf32>
    %26 = arith.addf %20, %25 : vector<256x64xf32>
    %27 = vector.broadcast %0 : vector<1x64xf32> to vector<256x64xf32>
    %28 = arith.addf %26, %27 : vector<256x64xf32>
    %cst = arith.constant 0.000000e+00 : f32
    %29 = vector.broadcast %cst : f32 to vector<256x64xf32>
    %30 = arith.maximumf %28, %29 : vector<256x64xf32>
    %c0_12 = arith.constant 0 : index
    %c0_13 = arith.constant 0 : index
    %31 = vector.load %arg3[%c0_12, %c0_13] : memref<64x64xbf16, #tpu.memory_space<vmem>>, vector<64x64xbf16>
    %32 = arith.truncf %30 : vector<256x64xf32> to vector<256x64xbf16>
    %cst_14 = arith.constant dense<0.000000e+00> : vector<256x64xf32>
    %33 = tpu.matmul %32, %31, %cst_14 {dimension_numbers = #tpu.dot_dimension_numbers<[1], [0], [0], [1], [0, 0, 1, 1], [], []>} : vector<256x64xbf16>, vector<64x64xbf16>, vector<256x64xf32> -> vector<256x64xf32>
    %34 = vector.broadcast %1 : vector<1x64xf32> to vector<256x64xf32>
    %35 = arith.addf %33, %34 : vector<256x64xf32>
    %cst_15 = arith.constant 0.000000e+00 : f32
    %36 = vector.broadcast %cst_15 : f32 to vector<256x64xf32>
    %37 = arith.maximumf %35, %36 : vector<256x64xf32>
    %c0_16 = arith.constant 0 : index
    %c0_17 = arith.constant 0 : index
    %38 = vector.load %arg4[%c0_16, %c0_17] : memref<64x128xbf16, #tpu.memory_space<vmem>>, vector<64x128xbf16>
    %39 = arith.truncf %37 : vector<256x64xf32> to vector<256x64xbf16>
    %cst_18 = arith.constant dense<0.000000e+00> : vector<256x128xf32>
    %40 = tpu.matmul %39, %38, %cst_18 {dimension_numbers = #tpu.dot_dimension_numbers<[1], [0], [0], [1], [0, 0, 1, 1], [], []>} : vector<256x64xbf16>, vector<64x128xbf16>, vector<256x128xf32> -> vector<256x128xf32>
    %41 = vector.broadcast %2 : vector<1x128xf32> to vector<256x128xf32>
    %42 = arith.addf %40, %41 : vector<256x128xf32>
    %cst_19 = arith.constant 0.000000e+00 : f32
    %43 = vector.broadcast %cst_19 : f32 to vector<256x128xf32>
    %44 = arith.maximumf %42, %43 : vector<256x128xf32>
    %c0_20 = arith.constant 0 : index
    %c0_21 = arith.constant 0 : index
    %45 = vector.load %arg5[%c0_20, %c0_21] : memref<128x256xbf16, #tpu.memory_space<vmem>>, vector<128x256xbf16>
    %46 = arith.truncf %44 : vector<256x128xf32> to vector<256x128xbf16>
    %cst_22 = arith.constant dense<0.000000e+00> : vector<256x256xf32>
    %47 = tpu.matmul %46, %45, %cst_22 {dimension_numbers = #tpu.dot_dimension_numbers<[1], [0], [0], [1], [0, 0, 1, 1], [], []>} : vector<256x128xbf16>, vector<128x256xbf16>, vector<256x256xf32> -> vector<256x256xf32>
    %48 = vector.broadcast %3 : vector<1x256xf32> to vector<256x256xf32>
    %49 = arith.addf %47, %48 : vector<256x256xf32>
    %cst_23 = arith.constant 0.000000e+00 : f32
    %50 = vector.broadcast %cst_23 : f32 to vector<256x256xf32>
    %51 = arith.maximumf %49, %50 : vector<256x256xf32>
    %52 = vector.shape_cast %37 : vector<256x64xf32> to vector<2x128x64xf32>
    %cst_24 = arith.constant dense<0xFF800000> : vector<2x64xf32>
    %53 = vector.multi_reduction <maximumf>, %52, %cst_24 [1] : vector<2x128x64xf32> to vector<2x64xf32>
    %54 = vector.shape_cast %44 : vector<256x128xf32> to vector<2x128x128xf32>
    %cst_25 = arith.constant dense<0xFF800000> : vector<2x128xf32>
    %55 = vector.multi_reduction <maximumf>, %54, %cst_25 [1] : vector<2x128x128xf32> to vector<2x128xf32>
    %56 = vector.shape_cast %51 : vector<256x256xf32> to vector<2x128x256xf32>
    %cst_26 = arith.constant dense<0xFF800000> : vector<2x256xf32>
    %57 = vector.multi_reduction <maximumf>, %56, %cst_26 [1] : vector<2x128x256xf32> to vector<2x256xf32>
    %c0_27 = arith.constant 0 : index
    %c0_28 = arith.constant 0 : index
    %58 = vector.load %arg6[%c0_27, %c0_28] : memref<448x256xbf16, #tpu.memory_space<vmem>>, vector<256x256xbf16>
    %59 = arith.truncf %57 : vector<2x256xf32> to vector<2x256xbf16>
    %cst_29 = arith.constant dense<0.000000e+00> : vector<2x256xf32>
    %60 = tpu.matmul %59, %58, %cst_29 {dimension_numbers = #tpu.dot_dimension_numbers<[1], [0], [0], [1], [0, 0, 1, 1], [], []>} : vector<2x256xbf16>, vector<256x256xbf16>, vector<2x256xf32> -> vector<2x256xf32>
    %c256 = arith.constant 256 : index
    %c0_30 = arith.constant 0 : index
    %61 = vector.load %arg6[%c256, %c0_30] : memref<448x256xbf16, #tpu.memory_space<vmem>>, vector<128x256xbf16>
    %62 = arith.truncf %55 : vector<2x128xf32> to vector<2x128xbf16>
    %cst_31 = arith.constant dense<0.000000e+00> : vector<2x256xf32>
    %63 = tpu.matmul %62, %61, %cst_31 {dimension_numbers = #tpu.dot_dimension_numbers<[1], [0], [0], [1], [0, 0, 1, 1], [], []>} : vector<2x128xbf16>, vector<128x256xbf16>, vector<2x256xf32> -> vector<2x256xf32>
    %64 = arith.addf %60, %63 : vector<2x256xf32>
    %c384 = arith.constant 384 : index
    %c0_32 = arith.constant 0 : index
    %65 = vector.load %arg6[%c384, %c0_32] : memref<448x256xbf16, #tpu.memory_space<vmem>>, vector<64x256xbf16>
    %66 = arith.truncf %53 : vector<2x64xf32> to vector<2x64xbf16>
    %cst_33 = arith.constant dense<0.000000e+00> : vector<2x256xf32>
    %67 = tpu.matmul %66, %65, %cst_33 {dimension_numbers = #tpu.dot_dimension_numbers<[1], [0], [0], [1], [0, 0, 1, 1], [], []>} : vector<2x64xbf16>, vector<64x256xbf16>, vector<2x256xf32> -> vector<2x256xf32>
    %68 = arith.addf %64, %67 : vector<2x256xf32>
    %69 = vector.broadcast %4 : vector<1x256xf32> to vector<2x256xf32>
    %70 = arith.addf %68, %69 : vector<2x256xf32>
    %cst_34 = arith.constant 0.000000e+00 : f32
    %71 = vector.broadcast %cst_34 : f32 to vector<2x256xf32>
    %72 = arith.maximumf %70, %71 : vector<2x256xf32>
    %c0_35 = arith.constant 0 : index
    %c0_36 = arith.constant 0 : index
    %73 = vector.load %arg7[%c0_35, %c0_36] : memref<256x128xbf16, #tpu.memory_space<vmem>>, vector<256x128xbf16>
    %74 = arith.truncf %72 : vector<2x256xf32> to vector<2x256xbf16>
    %cst_37 = arith.constant dense<0.000000e+00> : vector<2x128xf32>
    %75 = tpu.matmul %74, %73, %cst_37 {dimension_numbers = #tpu.dot_dimension_numbers<[1], [0], [0], [1], [0, 0, 1, 1], [], []>} : vector<2x256xbf16>, vector<256x128xbf16>, vector<2x128xf32> -> vector<2x128xf32>
    %76 = vector.broadcast %5 : vector<1x128xf32> to vector<2x128xf32>
    %77 = arith.addf %75, %76 : vector<2x128xf32>
    %cst_38 = arith.constant 0.000000e+00 : f32
    %78 = vector.broadcast %cst_38 : f32 to vector<2x128xf32>
    %79 = arith.maximumf %77, %78 : vector<2x128xf32>
    %c0_39 = arith.constant 0 : index
    %c0_40 = arith.constant 0 : index
    %80 = vector.load %arg8[%c0_39, %c0_40] : memref<128x16xbf16, #tpu.memory_space<vmem>>, vector<128x16xbf16>
    %81 = arith.truncf %79 : vector<2x128xf32> to vector<2x128xbf16>
    %cst_41 = arith.constant dense<0.000000e+00> : vector<2x16xf32>
    %82 = tpu.matmul %81, %80, %cst_41 {dimension_numbers = #tpu.dot_dimension_numbers<[1], [0], [0], [1], [0, 0, 1, 1], [], []>} : vector<2x128xbf16>, vector<128x16xbf16>, vector<2x16xf32> -> vector<2x16xf32>
    %83 = vector.broadcast %6 : vector<1x16xf32> to vector<2x16xf32>
    %84 = arith.addf %82, %83 : vector<2x16xf32>
    %cst_42 = arith.constant 0.000000e+00 : f32
    %85 = vector.broadcast %cst_42 : f32 to vector<2x16xf32>
    %86 = arith.maximumf %84, %85 : vector<2x16xf32>
    %c0_43 = arith.constant 0 : index
    %c0_44 = arith.constant 0 : index
    %87 = vector.load %arg9[%c0_43, %c0_44] : memref<1x16xbf16, #tpu.memory_space<vmem>>, vector<1x16xbf16>
    %88 = arith.truncf %86 : vector<2x16xf32> to vector<2x16xbf16>
    %cst_45 = arith.constant dense<0.000000e+00> : vector<1x2xf32>
    %89 = tpu.matmul %87, %88, %cst_45 {dimension_numbers = #tpu.dot_dimension_numbers<[1], [1], [0], [0], [0, 0, 1, 0], [], []>} : vector<1x16xbf16>, vector<2x16xbf16>, vector<1x2xf32> -> vector<1x2xf32>
    %90 = vector.broadcast %7 : vector<1x1xf32> to vector<1x2xf32>
    %91 = arith.addf %89, %90 : vector<1x2xf32>
    %92 = vector.shape_cast %91 : vector<1x2xf32> to vector<1x1x2xf32>
    %c0_46 = arith.constant 0 : index
    %c0_47 = arith.constant 0 : index
    %c0_48 = arith.constant 0 : index
    %93 = vector.load %arg11[%c0_46, %c0_47, %c0_48] : memref<1x1x2xf32, #tpu.memory_space<vmem>>, vector<1x1x2xf32>
    tpu.vector_store %arg11[%c0_46, %c0_47, %c0_48], %92 {strides = array<i32>} : memref<1x1x2xf32, #tpu.memory_space<vmem>>, vector<1x1x2xf32>,
    return
  }
  func.func @transform_0(%arg0: i32) -> (i32, i32) {
    %c0_i32 = arith.constant 0 : i32
    %c0_i32_0 = arith.constant 0 : i32
    return %arg0, %c0_i32 : i32, i32
  }
  func.func @transform_1(%arg0: i32) -> (i32, i32) {
    %c0_i32 = arith.constant 0 : i32
    %c0_i32_0 = arith.constant 0 : i32
    %c0_i32_1 = arith.constant 0 : i32
    return %c0_i32, %c0_i32_0 : i32, i32
  }
  func.func @transform_2(%arg0: i32) -> (i32, i32) {
    %c0_i32 = arith.constant 0 : i32
    %c0_i32_0 = arith.constant 0 : i32
    %c0_i32_1 = arith.constant 0 : i32
    return %c0_i32, %c0_i32_0 : i32, i32
  }
  func.func @transform_3(%arg0: i32) -> (i32, i32) {
    %c0_i32 = arith.constant 0 : i32
    %c0_i32_0 = arith.constant 0 : i32
    %c0_i32_1 = arith.constant 0 : i32
    return %c0_i32, %c0_i32_0 : i32, i32
  }
  func.func @transform_4(%arg0: i32) -> (i32, i32) {
    %c0_i32 = arith.constant 0 : i32
    %c0_i32_0 = arith.constant 0 : i32
    %c0_i32_1 = arith.constant 0 : i32
    return %c0_i32, %c0_i32_0 : i32, i32
  }
  func.func @transform_5(%arg0: i32) -> (i32, i32) {
    %c0_i32 = arith.constant 0 : i32
    %c0_i32_0 = arith.constant 0 : i32
    %c0_i32_1 = arith.constant 0 : i32
    return %c0_i32, %c0_i32_0 : i32, i32
  }
  func.func @transform_6(%arg0: i32) -> (i32, i32) {
    %c0_i32 = arith.constant 0 : i32
    %c0_i32_0 = arith.constant 0 : i32
    %c0_i32_1 = arith.constant 0 : i32
    return %c0_i32, %c0_i32_0 : i32, i32
  }
  func.func @transform_7(%arg0: i32) -> (i32, i32) {
    %c0_i32 = arith.constant 0 : i32
    %c0_i32_0 = arith.constant 0 : i32
    %c0_i32_1 = arith.constant 0 : i32
    return %c0_i32, %c0_i32_0 : i32, i32
  }
  func.func @transform_8(%arg0: i32) -> (i32, i32) {
    %c0_i32 = arith.constant 0 : i32
    %c0_i32_0 = arith.constant 0 : i32
    %c0_i32_1 = arith.constant 0 : i32
    return %c0_i32, %c0_i32_0 : i32, i32
  }
  func.func @transform_9(%arg0: i32) -> (i32, i32) {
    %c0_i32 = arith.constant 0 : i32
    %c0_i32_0 = arith.constant 0 : i32
    %c0_i32_1 = arith.constant 0 : i32
    return %c0_i32, %c0_i32_0 : i32, i32
  }
  func.func @transform_10(%arg0: i32) -> (i32, i32, i32) {
    %c0_i32 = arith.constant 0 : i32
    %c0_i32_0 = arith.constant 0 : i32
    %c0_i32_1 = arith.constant 0 : i32
    return %arg0, %c0_i32, %c0_i32_0 : i32, i32, i32
  }
}

</mosaic_0001>

<llo_original>
// kernel: pfdnet_forward.1
$region0: #{pfdnet_forward.1}
  #allocation0 [shape = 'u32[]', space=smem, size = 0x4, offset = 0x4, fixed_abs, tag = 'smem constant byte address 0x4 - core index']
  #allocation1 [shape = 'u32[144,128]{1,0:T(1,128)}', space=vmem, size = 0x12000, scoped, tag = 'internal scratch']
  %s0 = inlined_call_operand.vmem [shape: f32[512,3], index: 0, kind: input, shape index: {}]
  %s1 = inlined_call_operand.hbm [shape: f32[3,64], index: 1, kind: input, shape index: {}]
  %s2 = inlined_call_operand.hbm [shape: bf16[64,64], index: 2, kind: input, shape index: {}]
  %s3 = inlined_call_operand.hbm [shape: bf16[64,128], index: 3, kind: input, shape index: {}]
  %s4 = inlined_call_operand.vmem [shape: bf16[128,256], index: 4, kind: input, shape index: {}]
  %s5 = inlined_call_operand.vmem [shape: bf16[448,256], index: 5, kind: input, shape index: {}]
  %s6 = inlined_call_operand.hbm [shape: bf16[256,128], index: 6, kind: input, shape index: {}]
  %s7 = inlined_call_operand.vmem [shape: bf16[128,16], index: 7, kind: input, shape index: {}]
  %s8 = inlined_call_operand.vmem [shape: bf16[1,16], index: 8, kind: input, shape index: {}]
  %s9 = inlined_call_operand.vmem [shape: f32[8,256], index: 9, kind: input, shape index: {}]
  %s10 = inlined_call_operand.vmem [shape: f32[2,1,2], index: 10, kind: output, shape index: {}]
  %s11 = sld [smem:[#allocation0]]
  $region89: #{pfdnet_forward.1} parent=0
    _
  %s13 = ssub.s32 1, %s11
  %s14 = scalar_select 0, %s13, %s11
  $region1: #{pfdnet_forward.1} parent=0
    #allocation2 [shape = 'u8[2048]{0}', space=vmem, size = 0x800, scoped, tag = 'input window, operand 1, single buffered']
    #allocation3 [shape = 's32[2]{0}', space=sflag, size = 0x8, scoped, tag = 'scoped memory for pfdnet_forward.1']
    #allocation4 [shape = 'u8[16384]{0}', space=vmem, size = 0x4000, scoped, tag = 'input window, operand 2, single buffered']
    #allocation5 [shape = 's32[1]{0}', space=sflag, size = 0x4, scoped, tag = 'scoped memory for pfdnet_forward.1']
    #allocation6 [shape = 'u8[16384]{0}', space=vmem, size = 0x4000, scoped, tag = 'input window, operand 3, single buffered']
    #allocation7 [shape = 'u8[65536]{0}', space=vmem, size = 0x10000, scoped, tag = 'input window, operand 6, single buffered']
    #allocation8 [shape = 's32[1]{0}', space=sflag, size = 0x4, scoped, tag = 'scoped memory for pfdnet_forward.1']
    %15 = vsyncpa [#allocation3], 0
    %16 = vsyncpa [#allocation5], 0
    %17 = vsyncpa [#allocation8], 0
    loop: start=0, step=1, limit=4
    $region2: #{pfdnet_forward.1} parent=1 // loop_pre_header
      _
    $region3: #{pfdnet_forward.1} parent=1 // loop_header
      %s19 = sphi 0, %s23
      %p20 = scmp.ge.s32.totalorder %s19, 4
      %s29 = sphi 0, %s31
      %s32 = sphi 0, %s29
      %s33 = sphi 0, %s32
      %s49 = sphi 0, %s33
      %s53 = sphi 0, %s53
      %s55 = sphi 0, %s53
      %s56 = sphi 0, %s55
      %s70 = sphi 0, %s56
      %s74 = sphi 0, %s74
      %s76 = sphi 0, %s74
      %s77 = sphi 0, %s76
      %s91 = sphi 0, %s77
      %s95 = sphi 0, %s95
      %s97 = sphi 0, %s95
      %s98 = sphi 0, %s97
      %s112 = sphi 0, %s98
      %s116 = sphi 0, %s116
      %s118 = sphi 0, %s116
      %s119 = sphi 0, %s118
      %s133 = sphi 0, %s119
      %s137 = sphi 0, %s137
      %s139 = sphi 0, %s137
      %s140 = sphi 0, %s139
      %s154 = sphi 0, %s140
      %s158 = sphi 0, %s158
      %s160 = sphi 0, %s158
      %s161 = sphi 0, %s160
      %s175 = sphi 0, %s161
      %s179 = sphi 0, %s179
      %s181 = sphi 0, %s179
      %s182 = sphi 0, %s181
      %s196 = sphi 0, %s182
      %s200 = sphi 0, %s200
      %s202 = sphi 0, %s200
      %s203 = sphi 0, %s202
      %s217 = sphi 0, %s203
      %s221 = sphi 0, %s221
      %s223 = sphi 0, %s221
      %s224 = sphi 0, %s223
      %s238 = sphi 0, %s224
      %s244 = sphi 0, %s246
      %s247 = sphi 0, %s244
      %s248 = sphi 0, %s247
      %s264 = sphi 0, %s248
    $region4: #{pfdnet_forward.1} parent=1 // loop_header_branch
      %22 = sbr.rel (%p20) target = $region8
    $region5: #{pfdnet_forward.1} parent=1 // loop_body
      %s24 = ssub.s32 %s19, 1
      %s25 = ssub.s32 %s19, 2
      %s26 = sadd.s32 %s19, 1
      %s27 = ssub.s32 %s19, %s26
      %p28 = scmp.eq.s32.totalorder %s27, 0
      %s30 = sadd.s32 %s29, 1
      %s31 = scalar_select %p28, %s29, %s30
      %p34 = pneg %p28
      %p35 = scmp.eq.s32.totalorder %s19, 1
      %p36 = por %p34, %p35
      %p37 = scmp.ne.s32.totalorder %s29, %s32
      %p38 = scmp.eq.s32.totalorder %s19, 0
      %p39 = por %p37, %p38
      %p40 = scmp.ne.s32.totalorder %s29, %s32
      %p41 = scmp.eq.s32.totalorder %s24, 1
      %p42 = por %p40, %p41
      %p43 = scmp.ne.s32.totalorder %s32, %s33
      %p44 = scmp.eq.s32.totalorder %s24, 0
      %p45 = por %p43, %p44
      %p46 = scmp.ne.s32.totalorder %s32, %s33
      %p47 = scmp.eq.s32.totalorder %s25, 1
      %p48 = por %p46, %p47
      %p50 = scmp.ne.s32.totalorder %s33, %s49
      %p51 = scmp.eq.s32.totalorder %s25, 0
      %p52 = por %p50, %p51
      %s54 = sadd.s32 %s53, 1
      %p57 = scmp.eq.s32.totalorder %s19, 1
      %p58 = scmp.ne.s32.totalorder %s53, %s55
      %p59 = scmp.eq.s32.totalorder %s19, 0
      %p60 = por %p58, %p59
      %p61 = scmp.ne.s32.totalorder %s53, %s55
      %p62 = scmp.eq.s32.totalorder %s24, 1
      %p63 = por %p61, %p62
      %p64 = scmp.ne.s32.totalorder %s55, %s56
      %p65 = scmp.eq.s32.totalorder %s24, 0
      %p66 = por %p64, %p65
      %p67 = scmp.ne.s32.totalorder %s55, %s56
      %p68 = scmp.eq.s32.totalorder %s25, 1
      %p69 = por %p67, %p68
      %p71 = scmp.ne.s32.totalorder %s56, %s70
      %p72 = scmp.eq.s32.totalorder %s25, 0
      %p73 = por %p71, %p72
      %s75 = sadd.s32 %s74, 1
      %p78 = scmp.eq.s32.totalorder %s19, 1
      %p79 = scmp.ne.s32.totalorder %s74, %s76
      %p80 = scmp.eq.s32.totalorder %s19, 0
      %p81 = por %p79, %p80
      %p82 = scmp.ne.s32.totalorder %s74, %s76
      %p83 = scmp.eq.s32.totalorder %s24, 1
      %p84 = por %p82, %p83
      %p85 = scmp.ne.s32.totalorder %s76, %s77
      %p86 = scmp.eq.s32.totalorder %s24, 0
      %p87 = por %p85, %p86
      %p88 = scmp.ne.s32.totalorder %s76, %s77
      %p89 = scmp.eq.s32.totalorder %s25, 1
      %p90 = por %p88, %p89
      %p92 = scmp.ne.s32.totalorder %s77, %s91
      %p93 = scmp.eq.s32.totalorder %s25, 0
      %p94 = por %p92, %p93
      %s96 = sadd.s32 %s95, 1
      %p99 = scmp.eq.s32.totalorder %s19, 1
      %p100 = scmp.ne.s32.totalorder %s95, %s97
      %p101 = scmp.eq.s32.totalorder %s19, 0
      %p102 = por %p100, %p101
      %p103 = scmp.ne.s32.totalorder %s95, %s97
      %p104 = scmp.eq.s32.totalorder %s24, 1
      %p105 = por %p103, %p104
      %p106 = scmp.ne.s32.totalorder %s97, %s98
      %p107 = scmp.eq.s32.totalorder %s24, 0
      %p108 = por %p106, %p107
      %p109 = scmp.ne.s32.totalorder %s97, %s98
      %p110 = scmp.eq.s32.totalorder %s25, 1
      %p111 = por %p109, %p110
      %p113 = scmp.ne.s32.totalorder %s98, %s112
      %p114 = scmp.eq.s32.totalorder %s25, 0
      %p115 = por %p113, %p114
      %s117 = sadd.s32 %s116, 1
      %p120 = scmp.eq.s32.totalorder %s19, 1
      %p121 = scmp.ne.s32.totalorder %s116, %s118
      %p122 = scmp.eq.s32.totalorder %s19, 0
      %p123 = por %p121, %p122
      %p124 = scmp.ne.s32.totalorder %s116, %s118
      %p125 = scmp.eq.s32.totalorder %s24, 1
      %p126 = por %p124, %p125
      %p127 = scmp.ne.s32.totalorder %s118, %s119
      %p128 = scmp.eq.s32.totalorder %s24, 0
      %p129 = por %p127, %p128
      %p130 = scmp.ne.s32.totalorder %s118, %s119
      %p131 = scmp.eq.s32.totalorder %s25, 1
      %p132 = por %p130, %p131
      %p134 = scmp.ne.s32.totalorder %s119, %s133
      %p135 = scmp.eq.s32.totalorder %s25, 0
      %p136 = por %p134, %p135
      %s138 = sadd.s32 %s137, 1
      %p141 = scmp.eq.s32.totalorder %s19, 1
      %p142 = scmp.ne.s32.totalorder %s137, %s139
      %p143 = scmp.eq.s32.totalorder %s19, 0
      %p144 = por %p142, %p143
      %p145 = scmp.ne.s32.totalorder %s137, %s139
      %p146 = scmp.eq.s32.totalorder %s24, 1
      %p147 = por %p145, %p146
      %p148 = scmp.ne.s32.totalorder %s139, %s140
      %p149 = scmp.eq.s32.totalorder %s24, 0
      %p150 = por %p148, %p149
      %p151 = scmp.ne.s32.totalorder %s139, %s140
      %p152 = scmp.eq.s32.totalorder %s25, 1
      %p153 = por %p151, %p152
      %p155 = scmp.ne.s32.totalorder %s140, %s154
      %p156 = scmp.eq.s32.totalorder %s25, 0
      %p157 = por %p155, %p156
      %s159 = sadd.s32 %s158, 1
      %p162 = scmp.eq.s32.totalorder %s19, 1
      %p163 = scmp.ne.s32.totalorder %s158, %s160
      %p164 = scmp.eq.s32.totalorder %s19, 0
      %p165 = por %p163, %p164
      %p166 = scmp.ne.s32.totalorder %s158, %s160
      %p167 = scmp.eq.s32.totalorder %s24, 1
      %p168 = por %p166, %p167
      %p169 = scmp.ne.s32.totalorder %s160, %s161
      %p170 = scmp.eq.s32.totalorder %s24, 0
      %p171 = por %p169, %p170
      %p172 = scmp.ne.s32.totalorder %s160, %s161
      %p173 = scmp.eq.s32.totalorder %s25, 1
      %p174 = por %p172, %p173
      %p176 = scmp.ne.s32.totalorder %s161, %s175
      %p177 = scmp.eq.s32.totalorder %s25, 0
      %p178 = por %p176, %p177
      %s180 = sadd.s32 %s179, 1
      %p183 = scmp.eq.s32.totalorder %s19, 1
      %p184 = scmp.ne.s32.totalorder %s179, %s181
      %p185 = scmp.eq.s32.totalorder %s19, 0
      %p186 = por %p184, %p185
      %p187 = scmp.ne.s32.totalorder %s179, %s181
      %p188 = scmp.eq.s32.totalorder %s24, 1
      %p189 = por %p187, %p188
      %p190 = scmp.ne.s32.totalorder %s181, %s182
      %p191 = scmp.eq.s32.totalorder %s24, 0
      %p192 = por %p190, %p191
      %p193 = scmp.ne.s32.totalorder %s181, %s182
      %p194 = scmp.eq.s32.totalorder %s25, 1
      %p195 = por %p193, %p194
      %p197 = scmp.ne.s32.totalorder %s182, %s196
      %p198 = scmp.eq.s32.totalorder %s25, 0
      %p199 = por %p197, %p198
      %s201 = sadd.s32 %s200, 1
      %p204 = scmp.eq.s32.totalorder %s19, 1
      %p205 = scmp.ne.s32.totalorder %s200, %s202
      %p206 = scmp.eq.s32.totalorder %s19, 0
      %p207 = por %p205, %p206
      %p208 = scmp.ne.s32.totalorder %s200, %s202
      %p209 = scmp.eq.s32.totalorder %s24, 1
      %p210 = por %p208, %p209
      %p211 = scmp.ne.s32.totalorder %s202, %s203
      %p212 = scmp.eq.s32.totalorder %s24, 0
      %p213 = por %p211, %p212
      %p214 = scmp.ne.s32.totalorder %s202, %s203
      %p215 = scmp.eq.s32.totalorder %s25, 1
      %p216 = por %p214, %p215
      %p218 = scmp.ne.s32.totalorder %s203, %s217
      %p219 = scmp.eq.s32.totalorder %s25, 0
      %p220 = por %p218, %p219
      %s222 = sadd.s32 %s221, 1
      %p225 = scmp.eq.s32.totalorder %s19, 1
      %p226 = scmp.ne.s32.totalorder %s221, %s223
      %p227 = scmp.eq.s32.totalorder %s19, 0
      %p228 = por %p226, %p227
      %p229 = scmp.ne.s32.totalorder %s221, %s223
      %p230 = scmp.eq.s32.totalorder %s24, 1
      %p231 = por %p229, %p230
      %p232 = scmp.ne.s32.totalorder %s223, %s224
      %p233 = scmp.eq.s32.totalorder %s24, 0
      %p234 = por %p232, %p233
      %p235 = scmp.ne.s32.totalorder %s223, %s224
      %p236 = scmp.eq.s32.totalorder %s25, 1
      %p237 = por %p235, %p236
      %p239 = scmp.ne.s32.totalorder %s224, %s238
      %p240 = scmp.eq.s32.totalorder %s25, 0
      %p241 = por %p239, %p240
      %s242 = ssub.s32 %s19, %s26
      %p243 = scmp.eq.s32.totalorder %s242, 0
      %s245 = sadd.s32 %s244, 1
      %s246 = scalar_select %p243, %s244, %s245
      %p249 = pneg %p243
      %p250 = scmp.eq.s32.totalorder %s19, 1
      %p251 = por %p249, %p250
      %p252 = scmp.ne.s32.totalorder %s244, %s247
      %p253 = scmp.eq.s32.totalorder %s19, 0
      %p254 = por %p252, %p253
      %p255 = scmp.ne.s32.totalorder %s244, %s247
      %p256 = scmp.eq.s32.totalorder %s24, 1
      %p257 = por %p255, %p256
      %p258 = scmp.ne.s32.totalorder %s247, %s248
      %p259 = scmp.eq.s32.totalorder %s24, 0
      %p260 = por %p258, %p259
      %p261 = scmp.ne.s32.totalorder %s247, %s248
      %p262 = scmp.eq.s32.totalorder %s25, 1
      %p263 = por %p261, %p262
      %p265 = scmp.ne.s32.totalorder %s248, %s264
      %p266 = scmp.eq.s32.totalorder %s25, 0
      %p267 = por %p265, %p266
      %p268 = scmp.le.s32.totalorder 1, %s19
      %p269 = scmp.lt.s32.totalorder %s19, 3
      %p270 = pnand %p268, %p269
      %p271 = pneg %p270
      // Predicated region
      $region9: #{pfdnet_forward.1} parent=5 // pred_check
        _
      $region10: #{pfdnet_forward.1} parent=5 // pred_check_branch
        %273 = sbr.rel (%p270) target = $region12
      $region11: #{pfdnet_forward.1} parent=5 // pred_region
        %s274 = ssub.s32 %s19, 1
        // Predicated region
        $region13: #{pfdnet_forward.1} parent=11 // pred_check
          %p275 = pneg %p66
        $region14: #{pfdnet_forward.1} parent=11 // pred_check_branch
          %277 = sbr.rel (%p275) target = $region16
        $region15: #{pfdnet_forward.1} parent=11 // pred_region
          %s279 = ssub.s32 64, 64
          %280 = vsyncadd [#allocation3], %s279
          %s282 = sshll.u32 [#allocation2], 4
          %s283 = int_to_ptr.vmem [resolvable:$true] %s282
          %285 = dma.hbm_to_vmem [thread:$0]  %s1, 64, %s283, [#allocation3]
        $region16: #{pfdnet_forward.1} parent=11 // pred_fallthru
          _
        // Predicated region
        $region17: #{pfdnet_forward.1} parent=11 // pred_check
          %p286 = pneg %p87
        $region18: #{pfdnet_forward.1} parent=11 // pred_check_branch
          %288 = sbr.rel (%p286) target = $region20
        $region19: #{pfdnet_forward.1} parent=11 // pred_region
          %s290 = ssub.s32 512, 512
          %291 = vsyncadd [#allocation5], %s290
          %s292 = sshll.u32 [#allocation4], 4
          %s293 = int_to_ptr.vmem [resolvable:$true] %s292
          %298 = dma.hbm_to_vmem [thread:$0]  %s2, 512, %s293, [#allocation5], 64, 64, 4
        $region20: #{pfdnet_forward.1} parent=11 // pred_fallthru
          _
        // Predicated region
        $region21: #{pfdnet_forward.1} parent=11 // pred_check
          %p299 = pneg %p108
        $region22: #{pfdnet_forward.1} parent=11 // pred_check_branch
          %301 = sbr.rel (%p299) target = $region24
        $region23: #{pfdnet_forward.1} parent=11 // pred_region
          %s303 = ssub.s32 512, 512
          %304 = vsyncadd [#allocation5], %s303
          %s305 = sshll.u32 [#allocation6], 4
          %s306 = int_to_ptr.vmem [resolvable:$true] %s305
          %311 = dma.hbm_to_vmem [thread:$0]  %s3, 512, %s306, [#allocation5], 64, 64, 4
        $region24: #{pfdnet_forward.1} parent=11 // pred_fallthru
          _
        // Predicated region
        $region25: #{pfdnet_forward.1} parent=11 // pred_check
          %p312 = pneg %p129
        $region26: #{pfdnet_forward.1} parent=11 // pred_check_branch
          %314 = sbr.rel (%p312) target = $region28
        $region27: #{pfdnet_forward.1} parent=11 // pred_region
          _
        $region28: #{pfdnet_forward.1} parent=11 // pred_fallthru
          _
        // Predicated region
        $region29: #{pfdnet_forward.1} parent=11 // pred_check
          %p315 = pneg %p150
        $region30: #{pfdnet_forward.1} parent=11 // pred_check_branch
          %317 = sbr.rel (%p315) target = $region32
        $region31: #{pfdnet_forward.1} parent=11 // pred_region
          _
        $region32: #{pfdnet_forward.1} parent=11 // pred_fallthru
          _
        // Predicated region
        $region33: #{pfdnet_forward.1} parent=11 // pred_check
          %p318 = pneg %p171
        $region34: #{pfdnet_forward.1} parent=11 // pred_check_branch
          %320 = sbr.rel (%p318) target = $region36
        $region35: #{pfdnet_forward.1} parent=11 // pred_region
          %s322 = ssub.s32 2048, 2048
          %323 = vsyncadd [#allocation8], %s322
          %s324 = sshll.u32 [#allocation7], 4
          %s325 = int_to_ptr.vmem [resolvable:$true] %s324
          %330 = dma.hbm_to_vmem [thread:$0]  %s6, 2048, %s325, [#allocation8], 64, 64, 4
        $region36: #{pfdnet_forward.1} parent=11 // pred_fallthru
          _
        // Predicated region
        $region37: #{pfdnet_forward.1} parent=11 // pred_check
          %p331 = pneg %p192
        $region38: #{pfdnet_forward.1} parent=11 // pred_check_branch
          %333 = sbr.rel (%p331) target = $region40
        $region39: #{pfdnet_forward.1} parent=11 // pred_region
          _
        $region40: #{pfdnet_forward.1} parent=11 // pred_fallthru
          _
        // Predicated region
        $region41: #{pfdnet_forward.1} parent=11 // pred_check
          %p334 = pneg %p213
        $region42: #{pfdnet_forward.1} parent=11 // pred_check_branch
          %336 = sbr.rel (%p334) target = $region44
        $region43: #{pfdnet_forward.1} parent=11 // pred_region
          _
        $region44: #{pfdnet_forward.1} parent=11 // pred_fallthru
          _
        // Predicated region
        $region45: #{pfdnet_forward.1} parent=11 // pred_check
          %p337 = pneg %p234
        $region46: #{pfdnet_forward.1} parent=11 // pred_check_branch
          %339 = sbr.rel (%p337) target = $region48
        $region47: #{pfdnet_forward.1} parent=11 // pred_region
          _
        $region48: #{pfdnet_forward.1} parent=11 // pred_fallthru
          _
      $region12: #{pfdnet_forward.1} parent=5 // pred_fallthru
        _
      %p340 = scmp.lt.s32.totalorder %s19, 2
      // Predicated region
      $region49: #{pfdnet_forward.1} parent=5 // pred_check
        %p341 = pneg %p340
      $region50: #{pfdnet_forward.1} parent=5 // pred_check_branch
        %343 = sbr.rel (%p341) target = $region52
      $region51: #{pfdnet_forward.1} parent=5 // pred_region
        // Predicated region
        $region53: #{pfdnet_forward.1} parent=51 // pred_check
          %p344 = pneg %p39
        $region54: #{pfdnet_forward.1} parent=51 // pred_check_branch
          %346 = sbr.rel (%p344) target = $region56
        $region55: #{pfdnet_forward.1} parent=51 // pred_region
          %s347 = smul.u32 32, %s19
          %p348 = scmp.lt.s32.totalorder %s347, 63
          %s349 = scalar_select %p348, %s347, 63
          %s350 = smul.addr %s349, 8
          %s351 = scalar_lea.vmem %s0, %s350
          %s352 = smul.u32 32, %s19
        $region56: #{pfdnet_forward.1} parent=51 // pred_fallthru
          _
      $region52: #{pfdnet_forward.1} parent=5 // pred_fallthru
        _
      %p353 = scmp.le.s32.totalorder 1, %s19
      %p354 = scmp.lt.s32.totalorder %s19, 3
      %p355 = pnand %p353, %p354
      %p356 = pneg %p355
      // Predicated region
      $region57: #{pfdnet_forward.1} parent=5 // pred_check
        _
      $region58: #{pfdnet_forward.1} parent=5 // pred_check_branch
        %358 = sbr.rel (%p355) target = $region60
      $region59: #{pfdnet_forward.1} parent=5 // pred_region
        %s359 = ssub.s32 %s19, 1
        // Predicated region
        $region61: #{pfdnet_forward.1} parent=59 // pred_check
          %p360 = pneg %p66
        $region62: #{pfdnet_forward.1} parent=59 // pred_check_branch
          %362 = sbr.rel (%p360) target = $region64
        $region63: #{pfdnet_forward.1} parent=59 // pred_region
          %363 = dma.done [#allocation3], 64
        $region64: #{pfdnet_forward.1} parent=59 // pred_fallthru
          _
        // Predicated region
        $region65: #{pfdnet_forward.1} parent=59 // pred_check
          %p364 = pneg %p87
        $region66: #{pfdnet_forward.1} parent=59 // pred_check_branch
          %366 = sbr.rel (%p364) target = $region68
        $region67: #{pfdnet_forward.1} parent=59 // pred_region
          %367 = dma.done [#allocation5], 512
        $region68: #{pfdnet_forward.1} parent=59 // pred_fallthru
          _
        // Predicated region
        $region69: #{pfdnet_forward.1} parent=59 // pred_check
          %p368 = pneg %p108
        $region70: #{pfdnet_forward.1} parent=59 // pred_check_branch
          %370 = sbr.rel (%p368) target = $region72
        $region71: #{pfdnet_forward.1} parent=59 // pred_region
          %371 = dma.done [#allocation5], 512
        $region72: #{pfdnet_forward.1} parent=59 // pred_fallthru
          _
        // Predicated region
        $region73: #{pfdnet_forward.1} parent=59 // pred_check
          %p372 = pneg %p171
        $region74: #{pfdnet_forward.1} parent=59 // pred_check_branch
          %374 = sbr.rel (%p372) target = $region76
        $region75: #{pfdnet_forward.1} parent=59 // pred_region
          %375 = dma.done [#allocation8], 2048
        $region76: #{pfdnet_forward.1} parent=59 // pred_fallthru
          _
        %s376 = smul.u32 32, %s24
        %p377 = scmp.lt.s32.totalorder %s376, 63
        %s378 = scalar_select %p377, %s376, 63
        %s379 = smul.addr %s378, 8
        %s380 = scalar_lea.vmem %s0, %s379
        %p381 = pneg %p45
        %p382 = pneg %p42
        %p383 = pneg %p66
        %p384 = pneg %p63
        %p385 = pneg %p87
        %p386 = pneg %p84
        %p387 = pneg %p108
        %p388 = pneg %p105
        %p389 = pneg %p129
        %p390 = pneg %p126
        %p391 = pneg %p150
        %p392 = pneg %p147
        %p393 = pneg %p171
        %p394 = pneg %p168
        %p395 = pneg %p192
        %p396 = pneg %p189
        %p397 = pneg %p213
        %p398 = pneg %p210
        %p399 = pneg %p234
        %p400 = pneg %p231
        %p401 = pneg %p260
        %p402 = pneg %p257
        %p403 = scmp.lt.s32.totalorder %s24, 1
        %s404 = scalar_select %p403, %s24, 1
        %s405 = scalar_lea.vmem %s10, %s404
        %s406 = smul.u32 32, %s24
        %p407 = scmp.lt.s32.totalorder %s406, 63
        %s408 = scalar_select %p407, %s406, 63
        %s409 = smul.addr %s408, 8
        %s410 = scalar_lea.vmem %s0, %s409
        %s411 = smul.u32 32, %s24
        %p412 = scmp.lt.s32.totalorder %s24, 1
        %s413 = scalar_select %p412, %s24, 1
        %s414 = scalar_lea.vmem %s10, %s413
        %v416 = vld [vmem:[%s9] ss:$0 sm:$0xff]
        %v417 = vld [vmem:[%s9 + $0x1] ss:$0 sm:$0xff]
        %v418 = vld [vmem:[%s9 + $0x2] ss:$0 sm:$0xff]
        %s419 = scalar_lea.vmem %s9, 3
        %v420 = vld [vmem:[%s419] ss:$8 sm:$0x3]
        %s421 = scalar_lea.vmem %s9, 4
        %v422 = vld [vmem:[%s421] ss:$8 sm:$0x3]
        %v423 = vld [vmem:[%s9 + $0x5] ss:$0 sm:$0xff]
        %v424 = vld [vmem:[%s9 + $0x6] ss:$0 sm:$0xff]
        %v425 = vld [vmem:[%s9 + $0x7] ss:$0 sm:$0xff]
        %v426 = vld [vmem:[%s410] sm:$0xff]
        %v427 = vld [vmem:[%s410 + $0x8] sm:$0xff]
        %v428 = vld [vmem:[%s410 + $0x10] sm:$0xff]
        %v429 = vld [vmem:[%s410 + $0x18] sm:$0xff]
        %v430 = vld [vmem:[%s410 + $0x20] sm:$0xff]
        %v431 = vld [vmem:[%s410 + $0x28] sm:$0xff]
        %v432 = vld [vmem:[%s410 + $0x30] sm:$0xff]
        %v433 = vld [vmem:[%s410 + $0x38] sm:$0xff]
        %v434 = vld [vmem:[%s410 + $0x40] sm:$0xff]
        %v435 = vld [vmem:[%s410 + $0x48] sm:$0xff]
        %v436 = vld [vmem:[%s410 + $0x50] sm:$0xff]
        %v437 = vld [vmem:[%s410 + $0x58] sm:$0xff]
        %v438 = vld [vmem:[%s410 + $0x60] sm:$0xff]
        %v439 = vld [vmem:[%s410 + $0x68] sm:$0xff]
        %v440 = vld [vmem:[%s410 + $0x70] sm:$0xff]
        %v441 = vld [vmem:[%s410 + $0x78] sm:$0xff]
        %v442 = vld [vmem:[%s410 + $0x80] sm:$0xff]
        %v443 = vld [vmem:[%s410 + $0x88] sm:$0xff]
        %v444 = vld [vmem:[%s410 + $0x90] sm:$0xff]
        %v445 = vld [vmem:[%s410 + $0x98] sm:$0xff]
        %v446 = vld [vmem:[%s410 + $0xa0] sm:$0xff]
        %v447 = vld [vmem:[%s410 + $0xa8] sm:$0xff]
        %v448 = vld [vmem:[%s410 + $0xb0] sm:$0xff]
        %v449 = vld [vmem:[%s410 + $0xb8] sm:$0xff]
        %v450 = vld [vmem:[%s410 + $0xc0] sm:$0xff]
        %v451 = vld [vmem:[%s410 + $0xc8] sm:$0xff]
        %v452 = vld [vmem:[%s410 + $0xd0] sm:$0xff]
        %v453 = vld [vmem:[%s410 + $0xd8] sm:$0xff]
        %v454 = vld [vmem:[%s410 + $0xe0] sm:$0xff]
        %v455 = vld [vmem:[%s410 + $0xe8] sm:$0xff]
        %v456 = vld [vmem:[%s410 + $0xf0] sm:$0xff]
        %v457 = vld [vmem:[%s410 + $0xf8] sm:$0xff]
        %v458 = vld [vmem:[#allocation2] sm:$0x7]
        %460 = vset.pattern.permute.xlu0 0
        %461 = vperm.xlu0 %460, %v426
        %v462 = vpop.permute.xlu0 %461
        %465 = vset.pattern.permute.xlu0 0
        %466 = vperm.xlu0 %465, %v427
        %v467 = vpop.permute.xlu0 %466
        %470 = vset.pattern.permute.xlu0 0
        %471 = vperm.xlu0 %470, %v428
        %v472 = vpop.permute.xlu0 %471
        %475 = vset.pattern.permute.xlu0 0
        %476 = vperm.xlu0 %475, %v429
        %v477 = vpop.permute.xlu0 %476
        %480 = vset.pattern.permute.xlu0 0
        %481 = vperm.xlu0 %480, %v430
        %v482 = vpop.permute.xlu0 %481
        %485 = vset.pattern.permute.xlu0 0
        %486 = vperm.xlu0 %485, %v431
        %v487 = vpop.permute.xlu0 %486
        %490 = vset.pattern.permute.xlu0 0
        %491 = vperm.xlu0 %490, %v432
        %v492 = vpop.permute.xlu0 %491
        %495 = vset.pattern.permute.xlu0 0
        %496 = vperm.xlu0 %495, %v433
        %v497 = vpop.permute.xlu0 %496
        %500 = vset.pattern.permute.xlu0 0
        %501 = vperm.xlu0 %500, %v434
        %v502 = vpop.permute.xlu0 %501
        %505 = vset.pattern.permute.xlu0 0
        %506 = vperm.xlu0 %505, %v435
        %v507 = vpop.permute.xlu0 %506
        %510 = vset.pattern.permute.xlu0 0
        %511 = vperm.xlu0 %510, %v436
        %v512 = vpop.permute.xlu0 %511
        %515 = vset.pattern.permute.xlu0 0
        %516 = vperm.xlu0 %515, %v437
        %v517 = vpop.permute.xlu0 %516
        %520 = vset.pattern.permute.xlu0 0
        %521 = vperm.xlu0 %520, %v438
        %v522 = vpop.permute.xlu0 %521
        %525 = vset.pattern.permute.xlu0 0
        %526 = vperm.xlu0 %525, %v439
        %v527 = vpop.permute.xlu0 %526
        %530 = vset.pattern.permute.xlu0 0
        %531 = vperm.xlu0 %530, %v440
        %v532 = vpop.permute.xlu0 %531
        %535 = vset.pattern.permute.xlu0 0
        %536 = vperm.xlu0 %535, %v441
        %v537 = vpop.permute.xlu0 %536
        %540 = vset.pattern.permute.xlu0 0
        %541 = vperm.xlu0 %540, %v442
        %v542 = vpop.permute.xlu0 %541
        %545 = vset.pattern.permute.xlu0 0
        %546 = vperm.xlu0 %545, %v443
        %v547 = vpop.permute.xlu0 %546
        %550 = vset.pattern.permute.xlu0 0
        %551 = vperm.xlu0 %550, %v444
        %v552 = vpop.permute.xlu0 %551
        %555 = vset.pattern.permute.xlu0 0
        %556 = vperm.xlu0 %555, %v445
        %v557 = vpop.permute.xlu0 %556
        %560 = vset.pattern.permute.xlu0 0
        %561 = vperm.xlu0 %560, %v446
        %v562 = vpop.permute.xlu0 %561
        %565 = vset.pattern.permute.xlu0 0
        %566 = vperm.xlu0 %565, %v447
        %v567 = vpop.permute.xlu0 %566
        %570 = vset.pattern.permute.xlu0 0
        %571 = vperm.xlu0 %570, %v448
        %v572 = vpop.permute.xlu0 %571
        %575 = vset.pattern.permute.xlu0 0
        %576 = vperm.xlu0 %575, %v449
        %v577 = vpop.permute.xlu0 %576
        %580 = vset.pattern.permute.xlu0 0
        %581 = vperm.xlu0 %580, %v450
        %v582 = vpop.permute.xlu0 %581
        %585 = vset.pattern.permute.xlu0 0
        %586 = vperm.xlu0 %585, %v451
        %v587 = vpop.permute.xlu0 %586
        %590 = vset.pattern.permute.xlu0 0
        %591 = vperm.xlu0 %590, %v452
        %v592 = vpop.permute.xlu0 %591
        %595 = vset.pattern.permute.xlu0 0
        %596 = vperm.xlu0 %595, %v453
        %v597 = vpop.permute.xlu0 %596
        %600 = vset.pattern.permute.xlu0 0
        %601 = vperm.xlu0 %600, %v454
        %v602 = vpop.permute.xlu0 %601
        %605 = vset.pattern.permute.xlu0 0
        %606 = vperm.xlu0 %605, %v455
        %v607 = vpop.permute.xlu0 %606
        %610 = vset.pattern.permute.xlu0 0
        %611 = vperm.xlu0 %610, %v456
        %v612 = vpop.permute.xlu0 %611
        %615 = vset.pattern.permute.xlu0 0
        %616 = vperm.xlu0 %615, %v457
        %v617 = vpop.permute.xlu0 %616
        %v619 = vlaneseq
        %v620 = vshrl.u32 %v619, 7
        %v621 = vsub.s32 0, %v620
        %v622 = vrot.slane %v458, %v621
        %v623 = vmul.f32 %v462, %v622
        %v624 = vmul.f32 %v467, %v622
        %v625 = vmul.f32 %v472, %v622
        %v626 = vmul.f32 %v477, %v622
        %v627 = vmul.f32 %v482, %v622
        %v628 = vmul.f32 %v487, %v622
        %v629 = vmul.f32 %v492, %v622
        %v630 = vmul.f32 %v497, %v622
        %v631 = vmul.f32 %v502, %v622
        %v632 = vmul.f32 %v507, %v622
        %v633 = vmul.f32 %v512, %v622
        %v634 = vmul.f32 %v517, %v622
        %v635 = vmul.f32 %v522, %v622
        %v636 = vmul.f32 %v527, %v622
        %v637 = vmul.f32 %v532, %v622
        %v638 = vmul.f32 %v537, %v622
        %v639 = vmul.f32 %v542, %v622
        %v640 = vmul.f32 %v547, %v622
        %v641 = vmul.f32 %v552, %v622
        %v642 = vmul.f32 %v557, %v622
        %v643 = vmul.f32 %v562, %v622
        %v644 = vmul.f32 %v567, %v622
        %v645 = vmul.f32 %v572, %v622
        %v646 = vmul.f32 %v577, %v622
        %v647 = vmul.f32 %v582, %v622
        %v648 = vmul.f32 %v587, %v622
        %v649 = vmul.f32 %v592, %v622
        %v650 = vmul.f32 %v597, %v622
        %v651 = vmul.f32 %v602, %v622
        %v652 = vmul.f32 %v607, %v622
        %v653 = vmul.f32 %v612, %v622
        %v654 = vmul.f32 %v617, %v622
        %655 = vset.pattern.permute.xlu0 1
        %656 = vperm.xlu0 %655, %v426
        %v657 = vpop.permute.xlu0 %656
        %659 = vset.pattern.permute.xlu0 1
        %660 = vperm.xlu0 %659, %v427
        %v661 = vpop.permute.xlu0 %660
        %663 = vset.pattern.permute.xlu0 1
        %664 = vperm.xlu0 %663, %v428
        %v665 = vpop.permute.xlu0 %664
        %667 = vset.pattern.permute.xlu0 1
        %668 = vperm.xlu0 %667, %v429
        %v669 = vpop.permute.xlu0 %668
        %671 = vset.pattern.permute.xlu0 1
        %672 = vperm.xlu0 %671, %v430
        %v673 = vpop.permute.xlu0 %672
        %675 = vset.pattern.permute.xlu0 1
        %676 = vperm.xlu0 %675, %v431
        %v677 = vpop.permute.xlu0 %676
        %679 = vset.pattern.permute.xlu0 1
        %680 = vperm.xlu0 %679, %v432
        %v681 = vpop.permute.xlu0 %680
        %683 = vset.pattern.permute.xlu0 1
        %684 = vperm.xlu0 %683, %v433
        %v685 = vpop.permute.xlu0 %684
        %687 = vset.pattern.permute.xlu0 1
        %688 = vperm.xlu0 %687, %v434
        %v689 = vpop.permute.xlu0 %688
        %691 = vset.pattern.permute.xlu0 1
        %692 = vperm.xlu0 %691, %v435
        %v693 = vpop.permute.xlu0 %692
        %695 = vset.pattern.permute.xlu0 1
        %696 = vperm.xlu0 %695, %v436
        %v697 = vpop.permute.xlu0 %696
        %699 = vset.pattern.permute.xlu0 1
        %700 = vperm.xlu0 %699, %v437
        %v701 = vpop.permute.xlu0 %700
        %703 = vset.pattern.permute.xlu0 1
        %704 = vperm.xlu0 %703, %v438
        %v705 = vpop.permute.xlu0 %704
        %707 = vset.pattern.permute.xlu0 1
        %708 = vperm.xlu0 %707, %v439
        %v709 = vpop.permute.xlu0 %708
        %711 = vset.pattern.permute.xlu0 1
        %712 = vperm.xlu0 %711, %v440
        %v713 = vpop.permute.xlu0 %712
        %715 = vset.pattern.permute.xlu0 1
        %716 = vperm.xlu0 %715, %v441
        %v717 = vpop.permute.xlu0 %716
        %719 = vset.pattern.permute.xlu0 1
        %720 = vperm.xlu0 %719, %v442
        %v721 = vpop.permute.xlu0 %720
        %723 = vset.pattern.permute.xlu0 1
        %724 = vperm.xlu0 %723, %v443
        %v725 = vpop.permute.xlu0 %724
        %727 = vset.pattern.permute.xlu0 1
        %728 = vperm.xlu0 %727, %v444
        %v729 = vpop.permute.xlu0 %728
        %731 = vset.pattern.permute.xlu0 1
        %732 = vperm.xlu0 %731, %v445
        %v733 = vpop.permute.xlu0 %732
        %735 = vset.pattern.permute.xlu0 1
        %736 = vperm.xlu0 %735, %v446
        %v737 = vpop.permute.xlu0 %736
        %739 = vset.pattern.permute.xlu0 1
        %740 = vperm.xlu0 %739, %v447
        %v741 = vpop.permute.xlu0 %740
        %743 = vset.pattern.permute.xlu0 1
        %744 = vperm.xlu0 %743, %v448
        %v745 = vpop.permute.xlu0 %744
        %747 = vset.pattern.permute.xlu0 1
        %748 = vperm.xlu0 %747, %v449
        %v749 = vpop.permute.xlu0 %748
        %751 = vset.pattern.permute.xlu0 1
        %752 = vperm.xlu0 %751, %v450
        %v753 = vpop.permute.xlu0 %752
        %755 = vset.pattern.permute.xlu0 1
        %756 = vperm.xlu0 %755, %v451
        %v757 = vpop.permute.xlu0 %756
        %759 = vset.pattern.permute.xlu0 1
        %760 = vperm.xlu0 %759, %v452
        %v761 = vpop.permute.xlu0 %760
        %763 = vset.pattern.permute.xlu0 1
        %764 = vperm.xlu0 %763, %v453
        %v765 = vpop.permute.xlu0 %764
        %767 = vset.pattern.permute.xlu0 1
        %768 = vperm.xlu0 %767, %v454
        %v769 = vpop.permute.xlu0 %768
        %771 = vset.pattern.permute.xlu0 1
        %772 = vperm.xlu0 %771, %v455
        %v773 = vpop.permute.xlu0 %772
        %775 = vset.pattern.permute.xlu0 1
        %776 = vperm.xlu0 %775, %v456
        %v777 = vpop.permute.xlu0 %776
        %779 = vset.pattern.permute.xlu0 1
        %780 = vperm.xlu0 %779, %v457
        %v781 = vpop.permute.xlu0 %780
        %v783 = vlaneseq
        %v784 = vshrl.u32 %v783, 7
        %v785 = vsub.s32 1, %v784
        %v786 = vrot.slane %v458, %v785
        %v787 = vmul.f32 %v657, %v786
        %v788 = vmul.f32 %v661, %v786
        %v789 = vmul.f32 %v665, %v786
        %v790 = vmul.f32 %v669, %v786
        %v791 = vmul.f32 %v673, %v786
        %v792 = vmul.f32 %v677, %v786
        %v793 = vmul.f32 %v681, %v786
        %v794 = vmul.f32 %v685, %v786
        %v795 = vmul.f32 %v689, %v786
        %v796 = vmul.f32 %v693, %v786
        %v797 = vmul.f32 %v697, %v786
        %v798 = vmul.f32 %v701, %v786
        %v799 = vmul.f32 %v705, %v786
        %v800 = vmul.f32 %v709, %v786
        %v801 = vmul.f32 %v713, %v786
        %v802 = vmul.f32 %v717, %v786
        %v803 = vmul.f32 %v721, %v786
        %v804 = vmul.f32 %v725, %v786
        %v805 = vmul.f32 %v729, %v786
        %v806 = vmul.f32 %v733, %v786
        %v807 = vmul.f32 %v737, %v786
        %v808 = vmul.f32 %v741, %v786
        %v809 = vmul.f32 %v745, %v786
        %v810 = vmul.f32 %v749, %v786
        %v811 = vmul.f32 %v753, %v786
        %v812 = vmul.f32 %v757, %v786
        %v813 = vmul.f32 %v761, %v786
        %v814 = vmul.f32 %v765, %v786
        %v815 = vmul.f32 %v769, %v786
        %v816 = vmul.f32 %v773, %v786
        %v817 = vmul.f32 %v777, %v786
        %v818 = vmul.f32 %v781, %v786
        %v819 = vadd.f32 %v623, %v787
        %v820 = vadd.f32 %v624, %v788
        %v821 = vadd.f32 %v625, %v789
        %v822 = vadd.f32 %v626, %v790
        %v823 = vadd.f32 %v627, %v791
        %v824 = vadd.f32 %v628, %v792
        %v825 = vadd.f32 %v629, %v793
        %v826 = vadd.f32 %v630, %v794
        %v827 = vadd.f32 %v631, %v795
        %v828 = vadd.f32 %v632, %v796
        %v829 = vadd.f32 %v633, %v797
        %v830 = vadd.f32 %v634, %v798
        %v831 = vadd.f32 %v635, %v799
        %v832 = vadd.f32 %v636, %v800
        %v833 = vadd.f32 %v637, %v801
        %v834 = vadd.f32 %v638, %v802
        %v835 = vadd.f32 %v639, %v803
        %v836 = vadd.f32 %v640, %v804
        %v837 = vadd.f32 %v641, %v805
        %v838 = vadd.f32 %v642, %v806
        %v839 = vadd.f32 %v643, %v807
        %v840 = vadd.f32 %v644, %v808
        %v841 = vadd.f32 %v645, %v809
        %v842 = vadd.f32 %v646, %v810
        %v843 = vadd.f32 %v647, %v811
        %v844 = vadd.f32 %v648, %v812
        %v845 = vadd.f32 %v649, %v813
        %v846 = vadd.f32 %v650, %v814
        %v847 = vadd.f32 %v651, %v815
        %v848 = vadd.f32 %v652, %v816
        %v849 = vadd.f32 %v653, %v817
        %v850 = vadd.f32 %v654, %v818
        %851 = vset.pattern.permute.xlu0 2
        %852 = vperm.xlu0 %851, %v426
        %v853 = vpop.permute.xlu0 %852
        %855 = vset.pattern.permute.xlu0 2
        %856 = vperm.xlu0 %855, %v427
        %v857 = vpop.permute.xlu0 %856
        %859 = vset.pattern.permute.xlu0 2
        %860 = vperm.xlu0 %859, %v428
        %v861 = vpop.permute.xlu0 %860
        %863 = vset.pattern.permute.xlu0 2
        %864 = vperm.xlu0 %863, %v429
        %v865 = vpop.permute.xlu0 %864
        %867 = vset.pattern.permute.xlu0 2
        %868 = vperm.xlu0 %867, %v430
        %v869 = vpop.permute.xlu0 %868
        %871 = vset.pattern.permute.xlu0 2
        %872 = vperm.xlu0 %871, %v431
        %v873 = vpop.permute.xlu0 %872
        %875 = vset.pattern.permute.xlu0 2
        %876 = vperm.xlu0 %875, %v432
        %v877 = vpop.permute.xlu0 %876
        %879 = vset.pattern.permute.xlu0 2
        %880 = vperm.xlu0 %879, %v433
        %v881 = vpop.permute.xlu0 %880
        %883 = vset.pattern.permute.xlu0 2
        %884 = vperm.xlu0 %883, %v434
        %v885 = vpop.permute.xlu0 %884
        %887 = vset.pattern.permute.xlu0 2
        %888 = vperm.xlu0 %887, %v435
        %v889 = vpop.permute.xlu0 %888
        %891 = vset.pattern.permute.xlu0 2
        %892 = vperm.xlu0 %891, %v436
        %v893 = vpop.permute.xlu0 %892
        %895 = vset.pattern.permute.xlu0 2
        %896 = vperm.xlu0 %895, %v437
        %v897 = vpop.permute.xlu0 %896
        %899 = vset.pattern.permute.xlu0 2
        %900 = vperm.xlu0 %899, %v438
        %v901 = vpop.permute.xlu0 %900
        %903 = vset.pattern.permute.xlu0 2
        %904 = vperm.xlu0 %903, %v439
        %v905 = vpop.permute.xlu0 %904
        %907 = vset.pattern.permute.xlu0 2
        %908 = vperm.xlu0 %907, %v440
        %v909 = vpop.permute.xlu0 %908
        %911 = vset.pattern.permute.xlu0 2
        %912 = vperm.xlu0 %911, %v441
        %v913 = vpop.permute.xlu0 %912
        %915 = vset.pattern.permute.xlu0 2
        %916 = vperm.xlu0 %915, %v442
        %v917 = vpop.permute.xlu0 %916
        %919 = vset.pattern.permute.xlu0 2
        %920 = vperm.xlu0 %919, %v443
        %v921 = vpop.permute.xlu0 %920
        %923 = vset.pattern.permute.xlu0 2
        %924 = vperm.xlu0 %923, %v444
        %v925 = vpop.permute.xlu0 %924
        %927 = vset.pattern.permute.xlu0 2
        %928 = vperm.xlu0 %927, %v445
        %v929 = vpop.permute.xlu0 %928
        %931 = vset.pattern.permute.xlu0 2
        %932 = vperm.xlu0 %931, %v446
        %v933 = vpop.permute.xlu0 %932
        %935 = vset.pattern.permute.xlu0 2
        %936 = vperm.xlu0 %935, %v447
        %v937 = vpop.permute.xlu0 %936
        %939 = vset.pattern.permute.xlu0 2
        %940 = vperm.xlu0 %939, %v448
        %v941 = vpop.permute.xlu0 %940
        %943 = vset.pattern.permute.xlu0 2
        %944 = vperm.xlu0 %943, %v449
        %v945 = vpop.permute.xlu0 %944
        %947 = vset.pattern.permute.xlu0 2
        %948 = vperm.xlu0 %947, %v450
        %v949 = vpop.permute.xlu0 %948
        %951 = vset.pattern.permute.xlu0 2
        %952 = vperm.xlu0 %951, %v451
        %v953 = vpop.permute.xlu0 %952
        %955 = vset.pattern.permute.xlu0 2
        %956 = vperm.xlu0 %955, %v452
        %v957 = vpop.permute.xlu0 %956
        %959 = vset.pattern.permute.xlu0 2
        %960 = vperm.xlu0 %959, %v453
        %v961 = vpop.permute.xlu0 %960
        %963 = vset.pattern.permute.xlu0 2
        %964 = vperm.xlu0 %963, %v454
        %v965 = vpop.permute.xlu0 %964
        %967 = vset.pattern.permute.xlu0 2
        %968 = vperm.xlu0 %967, %v455
        %v969 = vpop.permute.xlu0 %968
        %971 = vset.pattern.permute.xlu0 2
        %972 = vperm.xlu0 %971, %v456
        %v973 = vpop.permute.xlu0 %972
        %975 = vset.pattern.permute.xlu0 2
        %976 = vperm.xlu0 %975, %v457
        %v977 = vpop.permute.xlu0 %976
        %v979 = vlaneseq
        %v980 = vshrl.u32 %v979, 7
        %v981 = vsub.s32 2, %v980
        %v982 = vrot.slane %v458, %v981
        %v983 = vmul.f32 %v853, %v982
        %v984 = vmul.f32 %v857, %v982
        %v985 = vmul.f32 %v861, %v982
        %v986 = vmul.f32 %v865, %v982
        %v987 = vmul.f32 %v869, %v982
        %v988 = vmul.f32 %v873, %v982
        %v989 = vmul.f32 %v877, %v982
        %v990 = vmul.f32 %v881, %v982
        %v991 = vmul.f32 %v885, %v982
        %v992 = vmul.f32 %v889, %v982
        %v993 = vmul.f32 %v893, %v982
        %v994 = vmul.f32 %v897, %v982
        %v995 = vmul.f32 %v901, %v982
        %v996 = vmul.f32 %v905, %v982
        %v997 = vmul.f32 %v909, %v982
        %v998 = vmul.f32 %v913, %v982
        %v999 = vmul.f32 %v917, %v982
        %v1000 = vmul.f32 %v921, %v982
        %v1001 = vmul.f32 %v925, %v982
        %v1002 = vmul.f32 %v929, %v982
        %v1003 = vmul.f32 %v933, %v982
        %v1004 = vmul.f32 %v937, %v982
        %v1005 = vmul.f32 %v941, %v982
        %v1006 = vmul.f32 %v945, %v982
        %v1007 = vmul.f32 %v949, %v982
        %v1008 = vmul.f32 %v953, %v982
        %v1009 = vmul.f32 %v957, %v982
        %v1010 = vmul.f32 %v961, %v982
        %v1011 = vmul.f32 %v965, %v982
        %v1012 = vmul.f32 %v969, %v982
        %v1013 = vmul.f32 %v973, %v982
        %v1014 = vmul.f32 %v977, %v982
        %v1015 = vadd.f32 %v819, %v983
        %v1016 = vadd.f32 %v820, %v984
        %v1017 = vadd.f32 %v821, %v985
        %v1018 = vadd.f32 %v822, %v986
        %v1019 = vadd.f32 %v823, %v987
        %v1020 = vadd.f32 %v824, %v988
        %v1021 = vadd.f32 %v825, %v989
        %v1022 = vadd.f32 %v826, %v990
        %v1023 = vadd.f32 %v827, %v991
        %v1024 = vadd.f32 %v828, %v992
        %v1025 = vadd.f32 %v829, %v993
        %v1026 = vadd.f32 %v830, %v994
        %v1027 = vadd.f32 %v831, %v995
        %v1028 = vadd.f32 %v832, %v996
        %v1029 = vadd.f32 %v833, %v997
        %v1030 = vadd.f32 %v834, %v998
        %v1031 = vadd.f32 %v835, %v999
        %v1032 = vadd.f32 %v836, %v1000
        %v1033 = vadd.f32 %v837, %v1001
        %v1034 = vadd.f32 %v838, %v1002
        %v1035 = vadd.f32 %v839, %v1003
        %v1036 = vadd.f32 %v840, %v1004
        %v1037 = vadd.f32 %v841, %v1005
        %v1038 = vadd.f32 %v842, %v1006
        %v1039 = vadd.f32 %v843, %v1007
        %v1040 = vadd.f32 %v844, %v1008
        %v1041 = vadd.f32 %v845, %v1009
        %v1042 = vadd.f32 %v846, %v1010
        %v1043 = vadd.f32 %v847, %v1011
        %v1044 = vadd.f32 %v848, %v1012
        %v1045 = vadd.f32 %v849, %v1013
        %v1046 = vadd.f32 %v850, %v1014
        %v1047 = vadd.f32 %v1015, %v416
        %v1048 = vadd.f32 %v1016, %v416
        %v1049 = vadd.f32 %v1017, %v416
        %v1050 = vadd.f32 %v1018, %v416
        %v1051 = vadd.f32 %v1019, %v416
        %v1052 = vadd.f32 %v1020, %v416
        %v1053 = vadd.f32 %v1021, %v416
        %v1054 = vadd.f32 %v1022, %v416
        %v1055 = vadd.f32 %v1023, %v416
        %v1056 = vadd.f32 %v1024, %v416
        %v1057 = vadd.f32 %v1025, %v416
        %v1058 = vadd.f32 %v1026, %v416
        %v1059 = vadd.f32 %v1027, %v416
        %v1060 = vadd.f32 %v1028, %v416
        %v1061 = vadd.f32 %v1029, %v416
        %v1062 = vadd.f32 %v1030, %v416
        %v1063 = vadd.f32 %v1031, %v416
        %v1064 = vadd.f32 %v1032, %v416
        %v1065 = vadd.f32 %v1033, %v416
        %v1066 = vadd.f32 %v1034, %v416
        %v1067 = vadd.f32 %v1035, %v416
        %v1068 = vadd.f32 %v1036, %v416
        %v1069 = vadd.f32 %v1037, %v416
        %v1070 = vadd.f32 %v1038, %v416
        %v1071 = vadd.f32 %v1039, %v416
        %v1072 = vadd.f32 %v1040, %v416
        %v1073 = vadd.f32 %v1041, %v416
        %v1074 = vadd.f32 %v1042, %v416
        %v1075 = vadd.f32 %v1043, %v416
        %v1076 = vadd.f32 %v1044, %v416
        %v1077 = vadd.f32 %v1045, %v416
        %v1078 = vadd.f32 %v1046, %v416
        %v1079 = vmax.f32 %v1047, 0.0
        %v1080 = vmax.f32 %v1048, 0.0
        %v1081 = vmax.f32 %v1049, 0.0
        %v1082 = vmax.f32 %v1050, 0.0
        %v1083 = vmax.f32 %v1051, 0.0
        %v1084 = vmax.f32 %v1052, 0.0
        %v1085 = vmax.f32 %v1053, 0.0
        %v1086 = vmax.f32 %v1054, 0.0
        %v1087 = vmax.f32 %v1055, 0.0
        %v1088 = vmax.f32 %v1056, 0.0
        %v1089 = vmax.f32 %v1057, 0.0
        %v1090 = vmax.f32 %v1058, 0.0
        %v1091 = vmax.f32 %v1059, 0.0
        %v1092 = vmax.f32 %v1060, 0.0
        %v1093 = vmax.f32 %v1061, 0.0
        %v1094 = vmax.f32 %v1062, 0.0
        %v1095 = vmax.f32 %v1063, 0.0
        %v1096 = vmax.f32 %v1064, 0.0
        %v1097 = vmax.f32 %v1065, 0.0
        %v1098 = vmax.f32 %v1066, 0.0
        %v1099 = vmax.f32 %v1067, 0.0
        %v1100 = vmax.f32 %v1068, 0.0
        %v1101 = vmax.f32 %v1069, 0.0
        %v1102 = vmax.f32 %v1070, 0.0
        %v1103 = vmax.f32 %v1071, 0.0
        %v1104 = vmax.f32 %v1072, 0.0
        %v1105 = vmax.f32 %v1073, 0.0
        %v1106 = vmax.f32 %v1074, 0.0
        %v1107 = vmax.f32 %v1075, 0.0
        %v1108 = vmax.f32 %v1076, 0.0
        %v1109 = vmax.f32 %v1077, 0.0
        %v1110 = vmax.f32 %v1078, 0.0
        %v1111 = vld [vmem:[#allocation4] sm:$0xf]
        %v1112 = vld [vmem:[#allocation4 + $0x4] sm:$0xf]
        %v1113 = vld [vmem:[#allocation4 + $0x8] sm:$0xf]
        %v1114 = vld [vmem:[#allocation4 + $0xc] sm:$0xf]
        %v1115 = vld [vmem:[#allocation4 + $0x10] sm:$0xf]
        %v1116 = vld [vmem:[#allocation4 + $0x14] sm:$0xf]
        %v1117 = vld [vmem:[#allocation4 + $0x18] sm:$0xf]
        %v1118 = vld [vmem:[#allocation4 + $0x1c] sm:$0xf]
        %v1119 = vpack.c.bf16 %v1080, %v1079
        %v1120 = vpack.c.bf16 %v1082, %v1081
        %v1121 = vpack.c.bf16 %v1084, %v1083
        %v1122 = vpack.c.bf16 %v1086, %v1085
        %v1123 = vpack.c.bf16 %v1088, %v1087
        %v1124 = vpack.c.bf16 %v1090, %v1089
        %v1125 = vpack.c.bf16 %v1092, %v1091
        %v1126 = vpack.c.bf16 %v1094, %v1093
        %v1127 = vpack.c.bf16 %v1096, %v1095
        %v1128 = vpack.c.bf16 %v1098, %v1097
        %v1129 = vpack.c.bf16 %v1100, %v1099
        %v1130 = vpack.c.bf16 %v1102, %v1101
        %v1131 = vpack.c.bf16 %v1104, %v1103
        %v1132 = vpack.c.bf16 %v1106, %v1105
        %v1133 = vpack.c.bf16 %v1108, %v1107
        %v1134 = vpack.c.bf16 %v1110, %v1109
        %v1143 = vunpack.c.l.b16 %v1111
        %v1144 = vunpack.c.l.b16 %v1112
        %v1145 = vunpack.c.l.b16 %v1113
        %v1146 = vunpack.c.l.b16 %v1114
        %v1147 = vunpack.c.l.b16 %v1115
        %v1148 = vunpack.c.l.b16 %v1116
        %v1149 = vunpack.c.l.b16 %v1117
        %v1150 = vunpack.c.l.b16 %v1118
        %v1151 = vpack.c.b16 %v1144, %v1143
        %v1152 = vpack.c.b16 %v1146, %v1145
        %v1153 = vpack.c.b16 %v1148, %v1147
        %v1154 = vpack.c.b16 %v1150, %v1149
        %vm1159 = vcmask 523264
        %v1161 = vsel %vm1159, %v1119, 0
        %v1164 = vsel %vm1159, %v1120, 0
        %v1167 = vsel %vm1159, %v1121, 0
        %v1170 = vsel %vm1159, %v1122, 0
        %v1173 = vsel %vm1159, %v1123, 0
        %v1176 = vsel %vm1159, %v1124, 0
        %v1179 = vsel %vm1159, %v1125, 0
        %v1182 = vsel %vm1159, %v1126, 0
        %v1185 = vsel %vm1159, %v1127, 0
        %v1188 = vsel %vm1159, %v1128, 0
        %v1191 = vsel %vm1159, %v1129, 0
        %v1194 = vsel %vm1159, %v1130, 0
        %v1197 = vsel %vm1159, %v1131, 0
        %v1200 = vsel %vm1159, %v1132, 0
        %v1203 = vsel %vm1159, %v1133, 0
        %v1206 = vsel %vm1159, %v1134, 0
        %1208 = vmatprep.subr.bf16.mxu0 0
        %1209 = vmatpush1.bf16.msra.mxu0 0
        %1210 = vmatprep.subr.bf16.mxu0 0
        %1211 = vmatpush1.bf16.msra.mxu0 0
        %1212 = vmatprep.subr.bf16.mxu0 0
        %1213 = vmatpush1.bf16.msra.mxu0 0
        %1214 = vmatprep.subr.bf16.mxu0 0
        %1215 = vmatpush1.bf16.msra.mxu0 0
        %1216 = vmatprep.subr.bf16.mxu0 0
        %1217 = vmatpush1.bf16.msra.mxu0 %v1154
        %1218 = vmatprep.subr.bf16.mxu0 0
        %1219 = vmatpush1.bf16.msra.mxu0 %v1153
        %1220 = vmatprep.subr.bf16.mxu0 0
        %1221 = vmatpush1.bf16.msra.mxu0 %v1152
        %1222 = vmatprep.subr.bf16.mxu0 0
        %1223 = vmatpush1.bf16.msra.mxu0 %v1151
        %1224 = vmatprep.subr.bf16.mxu0 0
        %1225 = vmatpush2.bf16.msra.mxu0 0
        %1226 = vmatprep.subr.bf16.mxu0 0
        %1227 = vmatpush2.bf16.msra.mxu0 0
        %1228 = vmatprep.subr.bf16.mxu0 0
        %1229 = vmatpush2.bf16.msra.mxu0 0
        %1230 = vmatprep.subr.bf16.mxu0 0
        %1231 = vmatpush2.bf16.msra.mxu0 0
        %1232 = vmatprep.subr.bf16.mxu0 0
        %1233 = vmatpush2.bf16.msra.mxu0 0
        %1234 = vmatprep.subr.bf16.mxu0 0
        %1235 = vmatpush2.bf16.msra.mxu0 0
        %1236 = vmatprep.subr.bf16.mxu0 0
        %1237 = vmatpush2.bf16.msra.mxu0 0
        %1238 = vmatprep.subr.bf16.mxu0 0
        %1239 = vmatpush2.bf16.msra.mxu0 0
        %1240 = vmatprep.mubr.bf16.mxu0 0
        %1241 = vmatmul.mubr.bf16.gmra.mxu0 %v1161
        %v1242 = vpop.f32.mrf.mxu0
        %v1243 = vadd.f32 %v417, %v1242
        %v1244 = vpop.f32.mrf.mxu0
        %v1245 = vpop.f32.mrf.mxu0
        %v1246 = vadd.f32 %v417, %v1245
        %v1247 = vpop.f32.mrf.mxu0
        %1248 = vmatprep.mubr.bf16.mxu0 0
        %1249 = vmatmul.mubr.bf16.gmra.mxu0 %v1164
        %v1250 = vpop.f32.mrf.mxu0
        %v1251 = vadd.f32 %v417, %v1250
        %v1252 = vpop.f32.mrf.mxu0
        %v1253 = vpop.f32.mrf.mxu0
        %v1254 = vadd.f32 %v417, %v1253
        %v1255 = vpop.f32.mrf.mxu0
        %1256 = vmatprep.mubr.bf16.mxu0 0
        %1257 = vmatmul.mubr.bf16.gmra.mxu0 %v1167
        %v1258 = vpop.f32.mrf.mxu0
        %v1259 = vadd.f32 %v417, %v1258
        %v1260 = vpop.f32.mrf.mxu0
        %v1261 = vpop.f32.mrf.mxu0
        %v1262 = vadd.f32 %v417, %v1261
        %v1263 = vpop.f32.mrf.mxu0
        %1264 = vmatprep.mubr.bf16.mxu0 0
        %1265 = vmatmul.mubr.bf16.gmra.mxu0 %v1170
        %v1266 = vpop.f32.mrf.mxu0
        %v1267 = vadd.f32 %v417, %v1266
        %v1268 = vpop.f32.mrf.mxu0
        %v1269 = vpop.f32.mrf.mxu0
        %v1270 = vadd.f32 %v417, %v1269
        %v1271 = vpop.f32.mrf.mxu0
        %1272 = vmatprep.mubr.bf16.mxu0 0
        %1273 = vmatmul.mubr.bf16.gmra.mxu0 %v1173
        %v1274 = vpop.f32.mrf.mxu0
        %v1275 = vadd.f32 %v417, %v1274
        %v1276 = vpop.f32.mrf.mxu0
        %v1277 = vpop.f32.mrf.mxu0
        %v1278 = vadd.f32 %v417, %v1277
        %v1279 = vpop.f32.mrf.mxu0
        %1280 = vmatprep.mubr.bf16.mxu0 0
        %1281 = vmatmul.mubr.bf16.gmra.mxu0 %v1176
        %v1282 = vpop.f32.mrf.mxu0
        %v1283 = vadd.f32 %v417, %v1282
        %v1284 = vpop.f32.mrf.mxu0
        %v1285 = vpop.f32.mrf.mxu0
        %v1286 = vadd.f32 %v417, %v1285
        %v1287 = vpop.f32.mrf.mxu0
        %1288 = vmatprep.mubr.bf16.mxu0 0
        %1289 = vmatmul.mubr.bf16.gmra.mxu0 %v1179
        %v1290 = vpop.f32.mrf.mxu0
        %v1291 = vadd.f32 %v417, %v1290
        %v1292 = vpop.f32.mrf.mxu0
        %v1293 = vpop.f32.mrf.mxu0
        %v1294 = vadd.f32 %v417, %v1293
        %v1295 = vpop.f32.mrf.mxu0
        %1296 = vmatprep.mubr.bf16.mxu0 0
        %1297 = vmatmul.mubr.bf16.gmra.mxu0 %v1182
        %v1298 = vpop.f32.mrf.mxu0
        %v1299 = vadd.f32 %v417, %v1298
        %v1300 = vpop.f32.mrf.mxu0
        %v1301 = vpop.f32.mrf.mxu0
        %v1302 = vadd.f32 %v417, %v1301
        %v1303 = vpop.f32.mrf.mxu0
        %1304 = vmatprep.mubr.bf16.mxu0 0
        %1305 = vmatmul.mubr.bf16.gmra.mxu0 %v1185
        %v1306 = vpop.f32.mrf.mxu0
        %v1307 = vadd.f32 %v417, %v1306
        %v1308 = vpop.f32.mrf.mxu0
        %v1309 = vpop.f32.mrf.mxu0
        %v1310 = vadd.f32 %v417, %v1309
        %v1311 = vpop.f32.mrf.mxu0
        %1312 = vmatprep.mubr.bf16.mxu0 0
        %1313 = vmatmul.mubr.bf16.gmra.mxu0 %v1188
        %v1314 = vpop.f32.mrf.mxu0
        %v1315 = vadd.f32 %v417, %v1314
        %v1316 = vpop.f32.mrf.mxu0
        %v1317 = vpop.f32.mrf.mxu0
        %v1318 = vadd.f32 %v417, %v1317
        %v1319 = vpop.f32.mrf.mxu0
        %1320 = vmatprep.mubr.bf16.mxu0 0
        %1321 = vmatmul.mubr.bf16.gmra.mxu0 %v1191
        %v1322 = vpop.f32.mrf.mxu0
        %v1323 = vadd.f32 %v417, %v1322
        %v1324 = vpop.f32.mrf.mxu0
        %v1325 = vpop.f32.mrf.mxu0
        %v1326 = vadd.f32 %v417, %v1325
        %v1327 = vpop.f32.mrf.mxu0
        %1328 = vmatprep.mubr.bf16.mxu0 0
        %1329 = vmatmul.mubr.bf16.gmra.mxu0 %v1194
        %v1330 = vpop.f32.mrf.mxu0
        %v1331 = vadd.f32 %v417, %v1330
        %v1332 = vpop.f32.mrf.mxu0
        %v1333 = vpop.f32.mrf.mxu0
        %v1334 = vadd.f32 %v417, %v1333
        %v1335 = vpop.f32.mrf.mxu0
        %1336 = vmatprep.mubr.bf16.mxu0 0
        %1337 = vmatmul.mubr.bf16.gmra.mxu0 %v1197
        %v1338 = vpop.f32.mrf.mxu0
        %v1339 = vadd.f32 %v417, %v1338
        %v1340 = vpop.f32.mrf.mxu0
        %v1341 = vpop.f32.mrf.mxu0
        %v1342 = vadd.f32 %v417, %v1341
        %v1343 = vpop.f32.mrf.mxu0
        %1344 = vmatprep.mubr.bf16.mxu0 0
        %1345 = vmatmul.mubr.bf16.gmra.mxu0 %v1200
        %v1346 = vpop.f32.mrf.mxu0
        %v1347 = vadd.f32 %v417, %v1346
        %v1348 = vpop.f32.mrf.mxu0
        %v1349 = vpop.f32.mrf.mxu0
        %v1350 = vadd.f32 %v417, %v1349
        %v1351 = vpop.f32.mrf.mxu0
        %1352 = vmatprep.mubr.bf16.mxu0 0
        %1353 = vmatmul.mubr.bf16.gmra.mxu0 %v1203
        %v1354 = vpop.f32.mrf.mxu0
        %v1355 = vadd.f32 %v417, %v1354
        %v1356 = vpop.f32.mrf.mxu0
        %v1357 = vpop.f32.mrf.mxu0
        %v1358 = vadd.f32 %v417, %v1357
        %v1359 = vpop.f32.mrf.mxu0
        %1360 = vmatprep.mubr.bf16.mxu0 0
        %1361 = vmatmul.mubr.bf16.gmra.mxu0 %v1206
        %v1362 = vpop.f32.mrf.mxu0
        %v1363 = vadd.f32 %v417, %v1362
        %v1364 = vpop.f32.mrf.mxu0
        %v1365 = vpop.f32.mrf.mxu0
        %v1366 = vadd.f32 %v417, %v1365
        %v1367 = vpop.f32.mrf.mxu0
        %1368 = vdwg.mxu0
        %v1369 = vmax.f32 %v1243, 0.0
        %v1370 = vmax.f32 %v1246, 0.0
        %v1371 = vmax.f32 %v1251, 0.0
        %v1372 = vmax.f32 %v1254, 0.0
        %v1373 = vmax.f32 %v1259, 0.0
        %v1374 = vmax.f32 %v1262, 0.0
        %v1375 = vmax.f32 %v1267, 0.0
        %v1376 = vmax.f32 %v1270, 0.0
        %v1377 = vmax.f32 %v1275, 0.0
        %v1378 = vmax.f32 %v1278, 0.0
        %v1379 = vmax.f32 %v1283, 0.0
        %v1380 = vmax.f32 %v1286, 0.0
        %v1381 = vmax.f32 %v1291, 0.0
        %v1382 = vmax.f32 %v1294, 0.0
        %v1383 = vmax.f32 %v1299, 0.0
        %v1384 = vmax.f32 %v1302, 0.0
        %v1385 = vmax.f32 %v1307, 0.0
        %v1386 = vmax.f32 %v1310, 0.0
        %v1387 = vmax.f32 %v1315, 0.0
        %v1388 = vmax.f32 %v1318, 0.0
        %v1389 = vmax.f32 %v1323, 0.0
        %v1390 = vmax.f32 %v1326, 0.0
        %v1391 = vmax.f32 %v1331, 0.0
        %v1392 = vmax.f32 %v1334, 0.0
        %v1393 = vmax.f32 %v1339, 0.0
        %v1394 = vmax.f32 %v1342, 0.0
        %v1395 = vmax.f32 %v1347, 0.0
        %v1396 = vmax.f32 %v1350, 0.0
        %v1397 = vmax.f32 %v1355, 0.0
        %v1398 = vmax.f32 %v1358, 0.0
        %v1399 = vmax.f32 %v1363, 0.0
        %v1400 = vmax.f32 %v1366, 0.0
        %v1401 = vld [vmem:[#allocation6] sm:$0xf]
        %v1402 = vld [vmem:[#allocation6 + $0x4] sm:$0xf]
        %v1403 = vld [vmem:[#allocation6 + $0x8] sm:$0xf]
        %v1404 = vld [vmem:[#allocation6 + $0xc] sm:$0xf]
        %v1405 = vld [vmem:[#allocation6 + $0x10] sm:$0xf]
        %v1406 = vld [vmem:[#allocation6 + $0x14] sm:$0xf]
        %v1407 = vld [vmem:[#allocation6 + $0x18] sm:$0xf]
        %v1408 = vld [vmem:[#allocation6 + $0x1c] sm:$0xf]
        %v1409 = vpack.c.bf16 %v1370, %v1369
        %v1410 = vpack.c.bf16 %v1372, %v1371
        %v1411 = vpack.c.bf16 %v1374, %v1373
        %v1412 = vpack.c.bf16 %v1376, %v1375
        %v1413 = vpack.c.bf16 %v1378, %v1377
        %v1414 = vpack.c.bf16 %v1380, %v1379
        %v1415 = vpack.c.bf16 %v1382, %v1381
        %v1416 = vpack.c.bf16 %v1384, %v1383
        %v1417 = vpack.c.bf16 %v1386, %v1385
        %v1418 = vpack.c.bf16 %v1388, %v1387
        %v1419 = vpack.c.bf16 %v1390, %v1389
        %v1420 = vpack.c.bf16 %v1392, %v1391
        %v1421 = vpack.c.bf16 %v1394, %v1393
        %v1422 = vpack.c.bf16 %v1396, %v1395
        %v1423 = vpack.c.bf16 %v1398, %v1397
        %v1424 = vpack.c.bf16 %v1400, %v1399
        %v1433 = vunpack.c.l.b16 %v1401
        %v1434 = vunpack.c.l.b16 %v1402
        %v1435 = vunpack.c.l.b16 %v1403
        %v1436 = vunpack.c.l.b16 %v1404
        %v1437 = vunpack.c.l.b16 %v1405
        %v1438 = vunpack.c.l.b16 %v1406
        %v1439 = vunpack.c.l.b16 %v1407
        %v1440 = vunpack.c.l.b16 %v1408
        %v1441 = vpack.c.b16 %v1434, %v1433
        %v1442 = vpack.c.b16 %v1436, %v1435
        %v1443 = vpack.c.b16 %v1438, %v1437
        %v1444 = vpack.c.b16 %v1440, %v1439
        %v1450 = vsel %vm1159, %v1409, 0
        %v1453 = vsel %vm1159, %v1410, 0
        %v1456 = vsel %vm1159, %v1411, 0
        %v1459 = vsel %vm1159, %v1412, 0
        %v1462 = vsel %vm1159, %v1413, 0
        %v1465 = vsel %vm1159, %v1414, 0
        %v1468 = vsel %vm1159, %v1415, 0
        %v1471 = vsel %vm1159, %v1416, 0
        %v1474 = vsel %vm1159, %v1417, 0
        %v1477 = vsel %vm1159, %v1418, 0
        %v1480 = vsel %vm1159, %v1419, 0
        %v1483 = vsel %vm1159, %v1420, 0
        %v1486 = vsel %vm1159, %v1421, 0
        %v1489 = vsel %vm1159, %v1422, 0
        %v1492 = vsel %vm1159, %v1423, 0
        %v1495 = vsel %vm1159, %v1424, 0
        %1497 = vmatprep.subr.bf16.mxu0 0
        %1498 = vmatpush1.bf16.msra.mxu0 0
        %1499 = vmatprep.subr.bf16.mxu0 0
        %1500 = vmatpush1.bf16.msra.mxu0 0
        %1501 = vmatprep.subr.bf16.mxu0 0
        %1502 = vmatpush1.bf16.msra.mxu0 0
        %1503 = vmatprep.subr.bf16.mxu0 0
        %1504 = vmatpush1.bf16.msra.mxu0 0
        %1505 = vmatprep.subr.bf16.mxu0 0
        %1506 = vmatpush1.bf16.msra.mxu0 %v1444
        %1507 = vmatprep.subr.bf16.mxu0 0
        %1508 = vmatpush1.bf16.msra.mxu0 %v1443
        %1509 = vmatprep.subr.bf16.mxu0 0
        %1510 = vmatpush1.bf16.msra.mxu0 %v1442
        %1511 = vmatprep.subr.bf16.mxu0 0
        %1512 = vmatpush1.bf16.msra.mxu0 %v1441
        %1513 = vmatprep.subr.bf16.mxu0 0
        %1514 = vmatpush2.bf16.msra.mxu0 0
        %1515 = vmatprep.subr.bf16.mxu0 0
        %1516 = vmatpush2.bf16.msra.mxu0 0
        %1517 = vmatprep.subr.bf16.mxu0 0
        %1518 = vmatpush2.bf16.msra.mxu0 0
        %1519 = vmatprep.subr.bf16.mxu0 0
        %1520 = vmatpush2.bf16.msra.mxu0 0
        %1521 = vmatprep.subr.bf16.mxu0 0
        %1522 = vmatpush2.bf16.msra.mxu0 0
        %1523 = vmatprep.subr.bf16.mxu0 0
        %1524 = vmatpush2.bf16.msra.mxu0 0
        %1525 = vmatprep.subr.bf16.mxu0 0
        %1526 = vmatpush2.bf16.msra.mxu0 0
        %1527 = vmatprep.subr.bf16.mxu0 0
        %1528 = vmatpush2.bf16.msra.mxu0 0
        %1529 = vmatprep.mubr.bf16.mxu0 0
        %1530 = vmatmul.mubr.bf16.gmra.mxu0 %v1450
        %v1531 = vpop.f32.mrf.mxu0
        %v1532 = vadd.f32 %v418, %v1531
        %v1533 = vpop.f32.mrf.mxu0
        %v1534 = vpop.f32.mrf.mxu0
        %v1535 = vadd.f32 %v418, %v1534
        %v1536 = vpop.f32.mrf.mxu0
        %1537 = vmatprep.mubr.bf16.mxu0 0
        %1538 = vmatmul.mubr.bf16.gmra.mxu0 %v1453
        %v1539 = vpop.f32.mrf.mxu0
        %v1540 = vadd.f32 %v418, %v1539
        %v1541 = vpop.f32.mrf.mxu0
        %v1542 = vpop.f32.mrf.mxu0
        %v1543 = vadd.f32 %v418, %v1542
        %v1544 = vpop.f32.mrf.mxu0
        %1545 = vmatprep.mubr.bf16.mxu0 0
        %1546 = vmatmul.mubr.bf16.gmra.mxu0 %v1456
        %v1547 = vpop.f32.mrf.mxu0
        %v1548 = vadd.f32 %v418, %v1547
        %v1549 = vpop.f32.mrf.mxu0
        %v1550 = vpop.f32.mrf.mxu0
        %v1551 = vadd.f32 %v418, %v1550
        %v1552 = vpop.f32.mrf.mxu0
        %1553 = vmatprep.mubr.bf16.mxu0 0
        %1554 = vmatmul.mubr.bf16.gmra.mxu0 %v1459
        %v1555 = vpop.f32.mrf.mxu0
        %v1556 = vadd.f32 %v418, %v1555
        %v1557 = vpop.f32.mrf.mxu0
        %v1558 = vpop.f32.mrf.mxu0
        %v1559 = vadd.f32 %v418, %v1558
        %v1560 = vpop.f32.mrf.mxu0
        %1561 = vmatprep.mubr.bf16.mxu0 0
        %1562 = vmatmul.mubr.bf16.gmra.mxu0 %v1462
        %v1563 = vpop.f32.mrf.mxu0
        %v1564 = vadd.f32 %v418, %v1563
        %v1565 = vpop.f32.mrf.mxu0
        %v1566 = vpop.f32.mrf.mxu0
        %v1567 = vadd.f32 %v418, %v1566
        %v1568 = vpop.f32.mrf.mxu0
        %1569 = vmatprep.mubr.bf16.mxu0 0
        %1570 = vmatmul.mubr.bf16.gmra.mxu0 %v1465
        %v1571 = vpop.f32.mrf.mxu0
        %v1572 = vadd.f32 %v418, %v1571
        %v1573 = vpop.f32.mrf.mxu0
        %v1574 = vpop.f32.mrf.mxu0
        %v1575 = vadd.f32 %v418, %v1574
        %v1576 = vpop.f32.mrf.mxu0
        %1577 = vmatprep.mubr.bf16.mxu0 0
        %1578 = vmatmul.mubr.bf16.gmra.mxu0 %v1468
        %v1579 = vpop.f32.mrf.mxu0
        %v1580 = vadd.f32 %v418, %v1579
        %v1581 = vpop.f32.mrf.mxu0
        %v1582 = vpop.f32.mrf.mxu0
        %v1583 = vadd.f32 %v418, %v1582
        %v1584 = vpop.f32.mrf.mxu0
        %1585 = vmatprep.mubr.bf16.mxu0 0
        %1586 = vmatmul.mubr.bf16.gmra.mxu0 %v1471
        %v1587 = vpop.f32.mrf.mxu0
        %v1588 = vadd.f32 %v418, %v1587
        %v1589 = vpop.f32.mrf.mxu0
        %v1590 = vpop.f32.mrf.mxu0
        %v1591 = vadd.f32 %v418, %v1590
        %v1592 = vpop.f32.mrf.mxu0
        %1593 = vmatprep.mubr.bf16.mxu0 0
        %1594 = vmatmul.mubr.bf16.gmra.mxu0 %v1474
        %v1595 = vpop.f32.mrf.mxu0
        %v1596 = vadd.f32 %v418, %v1595
        %v1597 = vpop.f32.mrf.mxu0
        %v1598 = vpop.f32.mrf.mxu0
        %v1599 = vadd.f32 %v418, %v1598
        %v1600 = vpop.f32.mrf.mxu0
        %1601 = vmatprep.mubr.bf16.mxu0 0
        %1602 = vmatmul.mubr.bf16.gmra.mxu0 %v1477
        %v1603 = vpop.f32.mrf.mxu0
        %v1604 = vadd.f32 %v418, %v1603
        %v1605 = vpop.f32.mrf.mxu0
        %v1606 = vpop.f32.mrf.mxu0
        %v1607 = vadd.f32 %v418, %v1606
        %v1608 = vpop.f32.mrf.mxu0
        %1609 = vmatprep.mubr.bf16.mxu0 0
        %1610 = vmatmul.mubr.bf16.gmra.mxu0 %v1480
        %v1611 = vpop.f32.mrf.mxu0
        %v1612 = vadd.f32 %v418, %v1611
        %v1613 = vpop.f32.mrf.mxu0
        %v1614 = vpop.f32.mrf.mxu0
        %v1615 = vadd.f32 %v418, %v1614
        %v1616 = vpop.f32.mrf.mxu0
        %1617 = vmatprep.mubr.bf16.mxu0 0
        %1618 = vmatmul.mubr.bf16.gmra.mxu0 %v1483
        %v1619 = vpop.f32.mrf.mxu0
        %v1620 = vadd.f32 %v418, %v1619
        %v1621 = vpop.f32.mrf.mxu0
        %v1622 = vpop.f32.mrf.mxu0
        %v1623 = vadd.f32 %v418, %v1622
        %v1624 = vpop.f32.mrf.mxu0
        %1625 = vmatprep.mubr.bf16.mxu0 0
        %1626 = vmatmul.mubr.bf16.gmra.mxu0 %v1486
        %v1627 = vpop.f32.mrf.mxu0
        %v1628 = vadd.f32 %v418, %v1627
        %v1629 = vpop.f32.mrf.mxu0
        %v1630 = vpop.f32.mrf.mxu0
        %v1631 = vadd.f32 %v418, %v1630
        %v1632 = vpop.f32.mrf.mxu0
        %1633 = vmatprep.mubr.bf16.mxu0 0
        %1634 = vmatmul.mubr.bf16.gmra.mxu0 %v1489
        %v1635 = vpop.f32.mrf.mxu0
        %v1636 = vadd.f32 %v418, %v1635
        %v1637 = vpop.f32.mrf.mxu0
        %v1638 = vpop.f32.mrf.mxu0
        %v1639 = vadd.f32 %v418, %v1638
        %v1640 = vpop.f32.mrf.mxu0
        %1641 = vmatprep.mubr.bf16.mxu0 0
        %1642 = vmatmul.mubr.bf16.gmra.mxu0 %v1492
        %v1643 = vpop.f32.mrf.mxu0
        %v1644 = vadd.f32 %v418, %v1643
        %v1645 = vpop.f32.mrf.mxu0
        %v1646 = vpop.f32.mrf.mxu0
        %v1647 = vadd.f32 %v418, %v1646
        %v1648 = vpop.f32.mrf.mxu0
        %1649 = vmatprep.mubr.bf16.mxu0 0
        %1650 = vmatmul.mubr.bf16.gmra.mxu0 %v1495
        %v1651 = vpop.f32.mrf.mxu0
        %v1652 = vadd.f32 %v418, %v1651
        %v1653 = vpop.f32.mrf.mxu0
        %v1654 = vpop.f32.mrf.mxu0
        %v1655 = vadd.f32 %v418, %v1654
        %v1656 = vpop.f32.mrf.mxu0
        %1657 = vdwg.mxu0
        %v1658 = vmax.f32 %v1532, 0.0
        %v1659 = vmax.f32 %v1535, 0.0
        %v1660 = vmax.f32 %v1540, 0.0
        %v1661 = vmax.f32 %v1543, 0.0
        %v1662 = vmax.f32 %v1548, 0.0
        %v1663 = vmax.f32 %v1551, 0.0
        %v1664 = vmax.f32 %v1556, 0.0
        %v1665 = vmax.f32 %v1559, 0.0
        %v1666 = vmax.f32 %v1564, 0.0
        %v1667 = vmax.f32 %v1567, 0.0
        %v1668 = vmax.f32 %v1572, 0.0
        %v1669 = vmax.f32 %v1575, 0.0
        %v1670 = vmax.f32 %v1580, 0.0
        %v1671 = vmax.f32 %v1583, 0.0
        %v1672 = vmax.f32 %v1588, 0.0
        %v1673 = vmax.f32 %v1591, 0.0
        %v1674 = vmax.f32 %v1596, 0.0
        %v1675 = vmax.f32 %v1599, 0.0
        %v1676 = vmax.f32 %v1604, 0.0
        %v1677 = vmax.f32 %v1607, 0.0
        %v1678 = vmax.f32 %v1612, 0.0
        %v1679 = vmax.f32 %v1615, 0.0
        %v1680 = vmax.f32 %v1620, 0.0
        %v1681 = vmax.f32 %v1623, 0.0
        %v1682 = vmax.f32 %v1628, 0.0
        %v1683 = vmax.f32 %v1631, 0.0
        %v1684 = vmax.f32 %v1636, 0.0
        %v1685 = vmax.f32 %v1639, 0.0
        %v1686 = vmax.f32 %v1644, 0.0
        %v1687 = vmax.f32 %v1647, 0.0
        %v1688 = vmax.f32 %v1652, 0.0
        %v1689 = vmax.f32 %v1655, 0.0
        %v1690 = vld [vmem:[%s4] sm:$0xff]
        %v1691 = vld [vmem:[%s4 + $0x8] sm:$0xff]
        %v1692 = vld [vmem:[%s4 + $0x10] sm:$0xff]
        %v1693 = vld [vmem:[%s4 + $0x18] sm:$0xff]
        %v1694 = vld [vmem:[%s4 + $0x20] sm:$0xff]
        %v1695 = vld [vmem:[%s4 + $0x28] sm:$0xff]
        %v1696 = vld [vmem:[%s4 + $0x30] sm:$0xff]
        %v1697 = vld [vmem:[%s4 + $0x38] sm:$0xff]
        %v1698 = vld [vmem:[%s4 + $0x40] sm:$0xff]
        %v1699 = vld [vmem:[%s4 + $0x48] sm:$0xff]
        %v1700 = vld [vmem:[%s4 + $0x50] sm:$0xff]
        %v1701 = vld [vmem:[%s4 + $0x58] sm:$0xff]
        %v1702 = vld [vmem:[%s4 + $0x60] sm:$0xff]
        %v1703 = vld [vmem:[%s4 + $0x68] sm:$0xff]
        %v1704 = vld [vmem:[%s4 + $0x70] sm:$0xff]
        %v1705 = vld [vmem:[%s4 + $0x78] sm:$0xff]
        %v1706 = vpack.c.bf16 %v1659, %v1658
        %v1707 = vpack.c.bf16 %v1661, %v1660
        %v1708 = vpack.c.bf16 %v1663, %v1662
        %v1709 = vpack.c.bf16 %v1665, %v1664
        %v1710 = vpack.c.bf16 %v1667, %v1666
        %v1711 = vpack.c.bf16 %v1669, %v1668
        %v1712 = vpack.c.bf16 %v1671, %v1670
        %v1713 = vpack.c.bf16 %v1673, %v1672
        %v1714 = vpack.c.bf16 %v1675, %v1674
        %v1715 = vpack.c.bf16 %v1677, %v1676
        %v1716 = vpack.c.bf16 %v1679, %v1678
        %v1717 = vpack.c.bf16 %v1681, %v1680
        %v1718 = vpack.c.bf16 %v1683, %v1682
        %v1719 = vpack.c.bf16 %v1685, %v1684
        %v1720 = vpack.c.bf16 %v1687, %v1686
        %v1721 = vpack.c.bf16 %v1689, %v1688
        %v1723 = vlaneseq
        %v1724 = vshrl.u32 %v1723, 7
        %v1725 = vsub.s32 0, %v1724
        %v1726 = vrot.slane %v420, %v1725
        %v1727 = vlaneseq
        %v1728 = vshrl.u32 %v1727, 7
        %v1729 = vsub.s32 1, %v1728
        %v1730 = vrot.slane %v420, %v1729
        %v1749 = vunpack.c.l.b16 %v1690
        %v1750 = vunpack.c.h.b16 %v1690
        %v1751 = vunpack.c.l.b16 %v1691
        %v1752 = vunpack.c.h.b16 %v1691
        %v1753 = vunpack.c.l.b16 %v1692
        %v1754 = vunpack.c.h.b16 %v1692
        %v1755 = vunpack.c.l.b16 %v1693
        %v1756 = vunpack.c.h.b16 %v1693
        %v1757 = vunpack.c.l.b16 %v1694
        %v1758 = vunpack.c.h.b16 %v1694
        %v1759 = vunpack.c.l.b16 %v1695
        %v1760 = vunpack.c.h.b16 %v1695
        %v1761 = vunpack.c.l.b16 %v1696
        %v1762 = vunpack.c.h.b16 %v1696
        %v1763 = vunpack.c.l.b16 %v1697
        %v1764 = vunpack.c.h.b16 %v1697
        %v1765 = vunpack.c.l.b16 %v1698
        %v1766 = vunpack.c.h.b16 %v1698
        %v1767 = vunpack.c.l.b16 %v1699
        %v1768 = vunpack.c.h.b16 %v1699
        %v1769 = vunpack.c.l.b16 %v1700
        %v1770 = vunpack.c.h.b16 %v1700
        %v1771 = vunpack.c.l.b16 %v1701
        %v1772 = vunpack.c.h.b16 %v1701
        %v1773 = vunpack.c.l.b16 %v1702
        %v1774 = vunpack.c.h.b16 %v1702
        %v1775 = vunpack.c.l.b16 %v1703
        %v1776 = vunpack.c.h.b16 %v1703
        %v1777 = vunpack.c.l.b16 %v1704
        %v1778 = vunpack.c.h.b16 %v1704
        %v1779 = vunpack.c.l.b16 %v1705
        %v1780 = vunpack.c.h.b16 %v1705
        %v1781 = vpack.c.b16 %v1751, %v1749
        %v1782 = vpack.c.b16 %v1752, %v1750
        %v1783 = vpack.c.b16 %v1755, %v1753
        %v1784 = vpack.c.b16 %v1756, %v1754
        %v1785 = vpack.c.b16 %v1759, %v1757
        %v1786 = vpack.c.b16 %v1760, %v1758
        %v1787 = vpack.c.b16 %v1763, %v1761
        %v1788 = vpack.c.b16 %v1764, %v1762
        %v1789 = vpack.c.b16 %v1767, %v1765
        %v1790 = vpack.c.b16 %v1768, %v1766
        %v1791 = vpack.c.b16 %v1771, %v1769
        %v1792 = vpack.c.b16 %v1772, %v1770
        %v1793 = vpack.c.b16 %v1775, %v1773
        %v1794 = vpack.c.b16 %v1776, %v1774
        %v1795 = vpack.c.b16 %v1779, %v1777
        %v1796 = vpack.c.b16 %v1780, %v1778
        %1813 = vmatprep.subr.bf16.mxu0 %v1796
        %1814 = vmatpush1.bf16.msra.mxu0 %v1795
        %1815 = vmatprep.subr.bf16.mxu0 %v1794
        %1816 = vmatpush1.bf16.msra.mxu0 %v1793
        %1817 = vmatprep.subr.bf16.mxu0 %v1792
        %1818 = vmatpush1.bf16.msra.mxu0 %v1791
        %1819 = vmatprep.subr.bf16.mxu0 %v1790
        %1820 = vmatpush1.bf16.msra.mxu0 %v1789
        %1821 = vmatprep.subr.bf16.mxu0 %v1788
        %1822 = vmatpush1.bf16.msra.mxu0 %v1787
        %1823 = vmatprep.subr.bf16.mxu0 %v1786
        %1824 = vmatpush1.bf16.msra.mxu0 %v1785
        %1825 = vmatprep.subr.bf16.mxu0 %v1784
        %1826 = vmatpush1.bf16.msra.mxu0 %v1783
        %1827 = vmatprep.subr.bf16.mxu0 %v1782
        %1828 = vmatpush1.bf16.msra.mxu0 %v1781
        %1829 = vmatprep.subr.bf16.mxu0 0
        %1830 = vmatpush2.bf16.msra.mxu0 0
        %1831 = vmatprep.subr.bf16.mxu0 0
        %1832 = vmatpush2.bf16.msra.mxu0 0
        %1833 = vmatprep.subr.bf16.mxu0 0
        %1834 = vmatpush2.bf16.msra.mxu0 0
        %1835 = vmatprep.subr.bf16.mxu0 0
        %1836 = vmatpush2.bf16.msra.mxu0 0
        %1837 = vmatprep.subr.bf16.mxu0 0
        %1838 = vmatpush2.bf16.msra.mxu0 0
        %1839 = vmatprep.subr.bf16.mxu0 0
        %1840 = vmatpush2.bf16.msra.mxu0 0
        %1841 = vmatprep.subr.bf16.mxu0 0
        %1842 = vmatpush2.bf16.msra.mxu0 0
        %1843 = vmatprep.subr.bf16.mxu0 0
        %1844 = vmatpush2.bf16.msra.mxu0 0
        %1845 = vmatprep.mubr.bf16.mxu0 0
        %1846 = vmatmul.mubr.bf16.gmra.mxu0 %v1706
        %v1847 = vpop.f32.mrf.mxu0
        %v1848 = vadd.f32 %v1726, %v1847
        %v1849 = vpop.f32.mrf.mxu0
        %v1850 = vadd.f32 %v1730, %v1849
        %v1851 = vpop.f32.mrf.mxu0
        %v1852 = vadd.f32 %v1726, %v1851
        %v1853 = vpop.f32.mrf.mxu0
        %v1854 = vadd.f32 %v1730, %v1853
        %1855 = vmatprep.mubr.bf16.mxu0 0
        %1856 = vmatmul.mubr.bf16.gmra.mxu0 %v1707
        %v1857 = vpop.f32.mrf.mxu0
        %v1858 = vadd.f32 %v1726, %v1857
        %v1859 = vpop.f32.mrf.mxu0
        %v1860 = vadd.f32 %v1730, %v1859
        %v1861 = vpop.f32.mrf.mxu0
        %v1862 = vadd.f32 %v1726, %v1861
        %v1863 = vpop.f32.mrf.mxu0
        %v1864 = vadd.f32 %v1730, %v1863
        %1865 = vmatprep.mubr.bf16.mxu0 0
        %1866 = vmatmul.mubr.bf16.gmra.mxu0 %v1708
        %v1867 = vpop.f32.mrf.mxu0
        %v1868 = vadd.f32 %v1726, %v1867
        %v1869 = vpop.f32.mrf.mxu0
        %v1870 = vadd.f32 %v1730, %v1869
        %v1871 = vpop.f32.mrf.mxu0
        %v1872 = vadd.f32 %v1726, %v1871
        %v1873 = vpop.f32.mrf.mxu0
        %v1874 = vadd.f32 %v1730, %v1873
        %1875 = vmatprep.mubr.bf16.mxu0 0
        %1876 = vmatmul.mubr.bf16.gmra.mxu0 %v1709
        %v1877 = vpop.f32.mrf.mxu0
        %v1878 = vadd.f32 %v1726, %v1877
        %v1879 = vpop.f32.mrf.mxu0
        %v1880 = vadd.f32 %v1730, %v1879
        %v1881 = vpop.f32.mrf.mxu0
        %v1882 = vadd.f32 %v1726, %v1881
        %v1883 = vpop.f32.mrf.mxu0
        %v1884 = vadd.f32 %v1730, %v1883
        %1885 = vmatprep.mubr.bf16.mxu0 0
        %1886 = vmatmul.mubr.bf16.gmra.mxu0 %v1710
        %v1887 = vpop.f32.mrf.mxu0
        %v1888 = vadd.f32 %v1726, %v1887
        %v1889 = vpop.f32.mrf.mxu0
        %v1890 = vadd.f32 %v1730, %v1889
        %v1891 = vpop.f32.mrf.mxu0
        %v1892 = vadd.f32 %v1726, %v1891
        %v1893 = vpop.f32.mrf.mxu0
        %v1894 = vadd.f32 %v1730, %v1893
        %1895 = vmatprep.mubr.bf16.mxu0 0
        %1896 = vmatmul.mubr.bf16.gmra.mxu0 %v1711
        %v1897 = vpop.f32.mrf.mxu0
        %v1898 = vadd.f32 %v1726, %v1897
        %v1899 = vpop.f32.mrf.mxu0
        %v1900 = vadd.f32 %v1730, %v1899
        %v1901 = vpop.f32.mrf.mxu0
        %v1902 = vadd.f32 %v1726, %v1901
        %v1903 = vpop.f32.mrf.mxu0
        %v1904 = vadd.f32 %v1730, %v1903
        %1905 = vmatprep.mubr.bf16.mxu0 0
        %1906 = vmatmul.mubr.bf16.gmra.mxu0 %v1712
        %v1907 = vpop.f32.mrf.mxu0
        %v1908 = vadd.f32 %v1726, %v1907
        %v1909 = vpop.f32.mrf.mxu0
        %v1910 = vadd.f32 %v1730, %v1909
        %v1911 = vpop.f32.mrf.mxu0
        %v1912 = vadd.f32 %v1726, %v1911
        %v1913 = vpop.f32.mrf.mxu0
        %v1914 = vadd.f32 %v1730, %v1913
        %1915 = vmatprep.mubr.bf16.mxu0 0
        %1916 = vmatmul.mubr.bf16.gmra.mxu0 %v1713
        %v1917 = vpop.f32.mrf.mxu0
        %v1918 = vadd.f32 %v1726, %v1917
        %v1919 = vpop.f32.mrf.mxu0
        %v1920 = vadd.f32 %v1730, %v1919
        %v1921 = vpop.f32.mrf.mxu0
        %v1922 = vadd.f32 %v1726, %v1921
        %v1923 = vpop.f32.mrf.mxu0
        %v1924 = vadd.f32 %v1730, %v1923
        %1925 = vmatprep.mubr.bf16.mxu0 0
        %1926 = vmatmul.mubr.bf16.gmra.mxu0 %v1714
        %v1927 = vpop.f32.mrf.mxu0
        %v1928 = vadd.f32 %v1726, %v1927
        %v1929 = vpop.f32.mrf.mxu0
        %v1930 = vadd.f32 %v1730, %v1929
        %v1931 = vpop.f32.mrf.mxu0
        %v1932 = vadd.f32 %v1726, %v1931
        %v1933 = vpop.f32.mrf.mxu0
        %v1934 = vadd.f32 %v1730, %v1933
        %1935 = vmatprep.mubr.bf16.mxu0 0
        %1936 = vmatmul.mubr.bf16.gmra.mxu0 %v1715
        %v1937 = vpop.f32.mrf.mxu0
        %v1938 = vadd.f32 %v1726, %v1937
        %v1939 = vpop.f32.mrf.mxu0
        %v1940 = vadd.f32 %v1730, %v1939
        %v1941 = vpop.f32.mrf.mxu0
        %v1942 = vadd.f32 %v1726, %v1941
        %v1943 = vpop.f32.mrf.mxu0
        %v1944 = vadd.f32 %v1730, %v1943
        %1945 = vmatprep.mubr.bf16.mxu0 0
        %1946 = vmatmul.mubr.bf16.gmra.mxu0 %v1716
        %v1947 = vpop.f32.mrf.mxu0
        %v1948 = vadd.f32 %v1726, %v1947
        %v1949 = vpop.f32.mrf.mxu0
        %v1950 = vadd.f32 %v1730, %v1949
        %v1951 = vpop.f32.mrf.mxu0
        %v1952 = vadd.f32 %v1726, %v1951
        %v1953 = vpop.f32.mrf.mxu0
        %v1954 = vadd.f32 %v1730, %v1953
        %1955 = vmatprep.mubr.bf16.mxu0 0
        %1956 = vmatmul.mubr.bf16.gmra.mxu0 %v1717
        %v1957 = vpop.f32.mrf.mxu0
        %v1958 = vadd.f32 %v1726, %v1957
        %v1959 = vpop.f32.mrf.mxu0
        %v1960 = vadd.f32 %v1730, %v1959
        %v1961 = vpop.f32.mrf.mxu0
        %v1962 = vadd.f32 %v1726, %v1961
        %v1963 = vpop.f32.mrf.mxu0
        %v1964 = vadd.f32 %v1730, %v1963
        %1965 = vmatprep.mubr.bf16.mxu0 0
        %1966 = vmatmul.mubr.bf16.gmra.mxu0 %v1718
        %v1967 = vpop.f32.mrf.mxu0
        %v1968 = vadd.f32 %v1726, %v1967
        %v1969 = vpop.f32.mrf.mxu0
        %v1970 = vadd.f32 %v1730, %v1969
        %v1971 = vpop.f32.mrf.mxu0
        %v1972 = vadd.f32 %v1726, %v1971
        %v1973 = vpop.f32.mrf.mxu0
        %v1974 = vadd.f32 %v1730, %v1973
        %1975 = vmatprep.mubr.bf16.mxu0 0
        %1976 = vmatmul.mubr.bf16.gmra.mxu0 %v1719
        %v1977 = vpop.f32.mrf.mxu0
        %v1978 = vadd.f32 %v1726, %v1977
        %v1979 = vpop.f32.mrf.mxu0
        %v1980 = vadd.f32 %v1730, %v1979
        %v1981 = vpop.f32.mrf.mxu0
        %v1982 = vadd.f32 %v1726, %v1981
        %v1983 = vpop.f32.mrf.mxu0
        %v1984 = vadd.f32 %v1730, %v1983
        %1985 = vmatprep.mubr.bf16.mxu0 0
        %1986 = vmatmul.mubr.bf16.gmra.mxu0 %v1720
        %v1987 = vpop.f32.mrf.mxu0
        %v1988 = vadd.f32 %v1726, %v1987
        %v1989 = vpop.f32.mrf.mxu0
        %v1990 = vadd.f32 %v1730, %v1989
        %v1991 = vpop.f32.mrf.mxu0
        %v1992 = vadd.f32 %v1726, %v1991
        %v1993 = vpop.f32.mrf.mxu0
        %v1994 = vadd.f32 %v1730, %v1993
        %1995 = vmatprep.mubr.bf16.mxu0 0
        %1996 = vmatmul.mubr.bf16.gmra.mxu0 %v1721
        %v1997 = vpop.f32.mrf.mxu0
        %v1998 = vadd.f32 %v1726, %v1997
        %v1999 = vpop.f32.mrf.mxu0
        %v2000 = vadd.f32 %v1730, %v1999
        %v2001 = vpop.f32.mrf.mxu0
        %v2002 = vadd.f32 %v1726, %v2001
        %v2003 = vpop.f32.mrf.mxu0
        %v2004 = vadd.f32 %v1730, %v2003
        %2005 = vdwg.mxu0
        %v2006 = vmax.f32 %v1848, 0.0
        %v2007 = vmax.f32 %v1850, 0.0
        %v2008 = vmax.f32 %v1852, 0.0
        %v2009 = vmax.f32 %v1854, 0.0
        %v2010 = vmax.f32 %v1858, 0.0
        %v2011 = vmax.f32 %v1860, 0.0
        %v2012 = vmax.f32 %v1862, 0.0
        %v2013 = vmax.f32 %v1864, 0.0
        %v2014 = vmax.f32 %v1868, 0.0
        %v2015 = vmax.f32 %v1870, 0.0
        %v2016 = vmax.f32 %v1872, 0.0
        %v2017 = vmax.f32 %v1874, 0.0
        %v2018 = vmax.f32 %v1878, 0.0
        %v2019 = vmax.f32 %v1880, 0.0
        %v2020 = vmax.f32 %v1882, 0.0
        %v2021 = vmax.f32 %v1884, 0.0
        %v2022 = vmax.f32 %v1888, 0.0
        %v2023 = vmax.f32 %v1890, 0.0
        %v2024 = vmax.f32 %v1892, 0.0
        %v2025 = vmax.f32 %v1894, 0.0
        %v2026 = vmax.f32 %v1898, 0.0
        %v2027 = vmax.f32 %v1900, 0.0
        %v2028 = vmax.f32 %v1902, 0.0
        %v2029 = vmax.f32 %v1904, 0.0
        %v2030 = vmax.f32 %v1908, 0.0
        %v2031 = vmax.f32 %v1910, 0.0
        %v2032 = vmax.f32 %v1912, 0.0
        %v2033 = vmax.f32 %v1914, 0.0
        %v2034 = vmax.f32 %v1918, 0.0
        %v2035 = vmax.f32 %v1920, 0.0
        %v2036 = vmax.f32 %v1922, 0.0
        %v2037 = vmax.f32 %v1924, 0.0
        %v2038 = vmax.f32 %v1928, 0.0
        %v2039 = vmax.f32 %v1930, 0.0
        %v2040 = vmax.f32 %v1932, 0.0
        %v2041 = vmax.f32 %v1934, 0.0
        %v2042 = vmax.f32 %v1938, 0.0
        %v2043 = vmax.f32 %v1940, 0.0
        %v2044 = vmax.f32 %v1942, 0.0
        %v2045 = vmax.f32 %v1944, 0.0
        %v2046 = vmax.f32 %v1948, 0.0
        %v2047 = vmax.f32 %v1950, 0.0
        %v2048 = vmax.f32 %v1952, 0.0
        %v2049 = vmax.f32 %v1954, 0.0
        %v2050 = vmax.f32 %v1958, 0.0
        %v2051 = vmax.f32 %v1960, 0.0
        %v2052 = vmax.f32 %v1962, 0.0
        %v2053 = vmax.f32 %v1964, 0.0
        %v2054 = vmax.f32 %v1968, 0.0
        %v2055 = vmax.f32 %v1970, 0.0
        %v2056 = vmax.f32 %v1972, 0.0
        %v2057 = vmax.f32 %v1974, 0.0
        %v2058 = vmax.f32 %v1978, 0.0
        %v2059 = vmax.f32 %v1980, 0.0
        %v2060 = vmax.f32 %v1982, 0.0
        %v2061 = vmax.f32 %v1984, 0.0
        %v2062 = vmax.f32 %v1988, 0.0
        %v2063 = vmax.f32 %v1990, 0.0
        %v2064 = vmax.f32 %v1992, 0.0
        %v2065 = vmax.f32 %v1994, 0.0
        %v2066 = vmax.f32 %v1998, 0.0
        %v2067 = vmax.f32 %v2000, 0.0
        %v2068 = vmax.f32 %v2002, 0.0
        %v2069 = vmax.f32 %v2004, 0.0
        %v2070 = vsel %vm1159, %v1369, -inf
        %v2071 = vsel %vm1159, %v1370, -inf
        %v2072 = vsel %vm1159, %v1371, -inf
        %v2073 = vmax.f32 %v2070, %v2072
        %v2074 = vsel %vm1159, %v1372, -inf
        %v2075 = vmax.f32 %v2071, %v2074
        %v2076 = vsel %vm1159, %v1373, -inf
        %v2077 = vmax.f32 %v2073, %v2076
        %v2078 = vsel %vm1159, %v1374, -inf
        %v2079 = vmax.f32 %v2075, %v2078
        %v2080 = vsel %vm1159, %v1375, -inf
        %v2081 = vmax.f32 %v2077, %v2080
        %v2082 = vsel %vm1159, %v1376, -inf
        %v2083 = vmax.f32 %v2079, %v2082
        %v2084 = vsel %vm1159, %v1377, -inf
        %v2085 = vmax.f32 %v2081, %v2084
        %v2086 = vsel %vm1159, %v1378, -inf
        %v2087 = vmax.f32 %v2083, %v2086
        %v2088 = vsel %vm1159, %v1379, -inf
        %v2089 = vmax.f32 %v2085, %v2088
        %v2090 = vsel %vm1159, %v1380, -inf
        %v2091 = vmax.f32 %v2087, %v2090
        %v2092 = vsel %vm1159, %v1381, -inf
        %v2093 = vmax.f32 %v2089, %v2092
        %v2094 = vsel %vm1159, %v1382, -inf
        %v2095 = vmax.f32 %v2091, %v2094
        %v2096 = vsel %vm1159, %v1383, -inf
        %v2097 = vmax.f32 %v2093, %v2096
        %v2098 = vsel %vm1159, %v1384, -inf
        %v2099 = vmax.f32 %v2095, %v2098
        %v2100 = vmax.f32 %v2097, %v2099
        %v2101 = vrot.slane %v2100, 4
        %v2102 = vmax.f32 %v2100, %v2101
        %v2103 = vrot.slane %v2102, 2
        %v2104 = vmax.f32 %v2102, %v2103
        %v2105 = vrot.slane %v2104, 1
        %v2106 = vmax.f32 %v2104, %v2105
        %v2107 = vsel %vm1159, %v1385, -inf
        %v2108 = vsel %vm1159, %v1386, -inf
        %v2109 = vsel %vm1159, %v1387, -inf
        %v2110 = vmax.f32 %v2107, %v2109
        %v2111 = vsel %vm1159, %v1388, -inf
        %v2112 = vmax.f32 %v2108, %v2111
        %v2113 = vsel %vm1159, %v1389, -inf
        %v2114 = vmax.f32 %v2110, %v2113
        %v2115 = vsel %vm1159, %v1390, -inf
        %v2116 = vmax.f32 %v2112, %v2115
        %v2117 = vsel %vm1159, %v1391, -inf
        %v2118 = vmax.f32 %v2114, %v2117
        %v2119 = vsel %vm1159, %v1392, -inf
        %v2120 = vmax.f32 %v2116, %v2119
        %v2121 = vsel %vm1159, %v1393, -inf
        %v2122 = vmax.f32 %v2118, %v2121
        %v2123 = vsel %vm1159, %v1394, -inf
        %v2124 = vmax.f32 %v2120, %v2123
        %v2125 = vsel %vm1159, %v1395, -inf
        %v2126 = vmax.f32 %v2122, %v2125
        %v2127 = vsel %vm1159, %v1396, -inf
        %v2128 = vmax.f32 %v2124, %v2127
        %v2129 = vsel %vm1159, %v1397, -inf
        %v2130 = vmax.f32 %v2126, %v2129
        %v2131 = vsel %vm1159, %v1398, -inf
        %v2132 = vmax.f32 %v2128, %v2131
        %v2133 = vsel %vm1159, %v1399, -inf
        %v2134 = vmax.f32 %v2130, %v2133
        %v2135 = vsel %vm1159, %v1400, -inf
        %v2136 = vmax.f32 %v2132, %v2135
        %v2137 = vmax.f32 %v2134, %v2136
        %v2138 = vrot.slane %v2137, 4
        %v2139 = vmax.f32 %v2137, %v2138
        %v2140 = vrot.slane %v2139, 2
        %v2141 = vmax.f32 %v2139, %v2140
        %v2142 = vrot.slane %v2141, 1
        %v2143 = vmax.f32 %v2141, %v2142
        %v2144 = vmax.f32 %v1658, %v1660
        %v2145 = vmax.f32 %v1659, %v1661
        %v2146 = vmax.f32 %v2144, %v1662
        %v2147 = vmax.f32 %v2145, %v1663
        %v2148 = vmax.f32 %v2146, %v1664
        %v2149 = vmax.f32 %v2147, %v1665
        %v2150 = vmax.f32 %v2148, %v1666
        %v2151 = vmax.f32 %v2149, %v1667
        %v2152 = vmax.f32 %v2150, %v1668
        %v2153 = vmax.f32 %v2151, %v1669
        %v2154 = vmax.f32 %v2152, %v1670
        %v2155 = vmax.f32 %v2153, %v1671
        %v2156 = vmax.f32 %v2154, %v1672
        %v2157 = vmax.f32 %v2155, %v1673
        %v2158 = vmax.f32 %v2156, %v2157
        %v2159 = vrot.slane %v2158, 4
        %v2160 = vmax.f32 %v2158, %v2159
        %v2161 = vrot.slane %v2160, 2
        %v2162 = vmax.f32 %v2160, %v2161
        %v2163 = vrot.slane %v2162, 1
        %v2164 = vmax.f32 %v2162, %v2163
        %v2165 = vmax.f32 %v1674, %v1676
        %v2166 = vmax.f32 %v1675, %v1677
        %v2167 = vmax.f32 %v2165, %v1678
        %v2168 = vmax.f32 %v2166, %v1679
        %v2169 = vmax.f32 %v2167, %v1680
        %v2170 = vmax.f32 %v2168, %v1681
        %v2171 = vmax.f32 %v2169, %v1682
        %v2172 = vmax.f32 %v2170, %v1683
        %v2173 = vmax.f32 %v2171, %v1684
        %v2174 = vmax.f32 %v2172, %v1685
        %v2175 = vmax.f32 %v2173, %v1686
        %v2176 = vmax.f32 %v2174, %v1687
        %v2177 = vmax.f32 %v2175, %v1688
        %v2178 = vmax.f32 %v2176, %v1689
        %v2179 = vmax.f32 %v2177, %v2178
        %v2180 = vrot.slane %v2179, 4
        %v2181 = vmax.f32 %v2179, %v2180
        %v2182 = vrot.slane %v2181, 2
        %v2183 = vmax.f32 %v2181, %v2182
        %v2184 = vrot.slane %v2183, 1
        %v2185 = vmax.f32 %v2183, %v2184
        %v2186 = vmax.f32 %v2006, %v2008
        %v2187 = vmax.f32 %v2186, %v2010
        %v2188 = vmax.f32 %v2187, %v2012
        %v2189 = vmax.f32 %v2188, %v2014
        %v2190 = vmax.f32 %v2189, %v2016
        %v2191 = vmax.f32 %v2190, %v2018
        %v2192 = vmax.f32 %v2191, %v2020
        %v2193 = vmax.f32 %v2192, %v2022
        %v2194 = vmax.f32 %v2193, %v2024
        %v2195 = vmax.f32 %v2194, %v2026
        %v2196 = vmax.f32 %v2195, %v2028
        %v2197 = vmax.f32 %v2196, %v2030
        %v2198 = vmax.f32 %v2197, %v2032
        %v2199 = vmax.f32 %v2198, %v2034
        %v2200 = vmax.f32 %v2199, %v2036
        %v2201 = vrot.slane %v2200, 4
        %v2202 = vmax.f32 %v2200, %v2201
        %v2203 = vrot.slane %v2202, 2
        %v2204 = vmax.f32 %v2202, %v2203
        %v2205 = vrot.slane %v2204, 1
        %v2206 = vmax.f32 %v2204, %v2205
        %v2207 = vmax.f32 %v2007, %v2009
        %v2208 = vmax.f32 %v2207, %v2011
        %v2209 = vmax.f32 %v2208, %v2013
        %v2210 = vmax.f32 %v2209, %v2015
        %v2211 = vmax.f32 %v2210, %v2017
        %v2212 = vmax.f32 %v2211, %v2019
        %v2213 = vmax.f32 %v2212, %v2021
        %v2214 = vmax.f32 %v2213, %v2023
        %v2215 = vmax.f32 %v2214, %v2025
        %v2216 = vmax.f32 %v2215, %v2027
        %v2217 = vmax.f32 %v2216, %v2029
        %v2218 = vmax.f32 %v2217, %v2031
        %v2219 = vmax.f32 %v2218, %v2033
        %v2220 = vmax.f32 %v2219, %v2035
        %v2221 = vmax.f32 %v2220, %v2037
        %v2222 = vrot.slane %v2221, 4
        %v2223 = vmax.f32 %v2221, %v2222
        %v2224 = vrot.slane %v2223, 2
        %v2225 = vmax.f32 %v2223, %v2224
        %v2226 = vrot.slane %v2225, 1
        %v2227 = vmax.f32 %v2225, %v2226
        %v2228 = vmax.f32 %v2038, %v2040
        %v2229 = vmax.f32 %v2228, %v2042
        %v2230 = vmax.f32 %v2229, %v2044
        %v2231 = vmax.f32 %v2230, %v2046
        %v2232 = vmax.f32 %v2231, %v2048
        %v2233 = vmax.f32 %v2232, %v2050
        %v2234 = vmax.f32 %v2233, %v2052
        %v2235 = vmax.f32 %v2234, %v2054
        %v2236 = vmax.f32 %v2235, %v2056
        %v2237 = vmax.f32 %v2236, %v2058
        %v2238 = vmax.f32 %v2237, %v2060
        %v2239 = vmax.f32 %v2238, %v2062
        %v2240 = vmax.f32 %v2239, %v2064
        %v2241 = vmax.f32 %v2240, %v2066
        %v2242 = vmax.f32 %v2241, %v2068
        %v2243 = vrot.slane %v2242, 4
        %v2244 = vmax.f32 %v2242, %v2243
        %v2245 = vrot.slane %v2244, 2
        %v2246 = vmax.f32 %v2244, %v2245
        %v2247 = vrot.slane %v2246, 1
        %v2248 = vmax.f32 %v2246, %v2247
        %v2249 = vmax.f32 %v2039, %v2041
        %v2250 = vmax.f32 %v2249, %v2043
        %v2251 = vmax.f32 %v2250, %v2045
        %v2252 = vmax.f32 %v2251, %v2047
        %v2253 = vmax.f32 %v2252, %v2049
        %v2254 = vmax.f32 %v2253, %v2051
        %v2255 = vmax.f32 %v2254, %v2053
        %v2256 = vmax.f32 %v2255, %v2055
        %v2257 = vmax.f32 %v2256, %v2057
        %v2258 = vmax.f32 %v2257, %v2059
        %v2259 = vmax.f32 %v2258, %v2061
        %v2260 = vmax.f32 %v2259, %v2063
        %v2261 = vmax.f32 %v2260, %v2065
        %v2262 = vmax.f32 %v2261, %v2067
        %v2263 = vmax.f32 %v2262, %v2069
        %v2264 = vrot.slane %v2263, 4
        %v2265 = vmax.f32 %v2263, %v2264
        %v2266 = vrot.slane %v2265, 2
        %v2267 = vmax.f32 %v2265, %v2266
        %v2268 = vrot.slane %v2267, 1
        %v2269 = vmax.f32 %v2267, %v2268
        %v2270 = vld [vmem:[%s5] sm:$0xff]
        %v2271 = vld [vmem:[%s5 + $0x8] sm:$0xff]
        %v2272 = vld [vmem:[%s5 + $0x10] sm:$0xff]
        %v2273 = vld [vmem:[%s5 + $0x18] sm:$0xff]
        %v2274 = vld [vmem:[%s5 + $0x20] sm:$0xff]
        %v2275 = vld [vmem:[%s5 + $0x28] sm:$0xff]
        %v2276 = vld [vmem:[%s5 + $0x30] sm:$0xff]
        %v2277 = vld [vmem:[%s5 + $0x38] sm:$0xff]
        %v2278 = vld [vmem:[%s5 + $0x40] sm:$0xff]
        %v2279 = vld [vmem:[%s5 + $0x48] sm:$0xff]
        %v2280 = vld [vmem:[%s5 + $0x50] sm:$0xff]
        %v2281 = vld [vmem:[%s5 + $0x58] sm:$0xff]
        %v2282 = vld [vmem:[%s5 + $0x60] sm:$0xff]
        %v2283 = vld [vmem:[%s5 + $0x68] sm:$0xff]
        %v2284 = vld [vmem:[%s5 + $0x70] sm:$0xff]
        %v2285 = vld [vmem:[%s5 + $0x78] sm:$0xff]
        %v2286 = vld [vmem:[%s5 + $0x80] sm:$0xff]
        %v2287 = vld [vmem:[%s5 + $0x88] sm:$0xff]
        %v2288 = vld [vmem:[%s5 + $0x90] sm:$0xff]
        %v2289 = vld [vmem:[%s5 + $0x98] sm:$0xff]
        %v2290 = vld [vmem:[%s5 + $0xa0] sm:$0xff]
        %v2291 = vld [vmem:[%s5 + $0xa8] sm:$0xff]
        %v2292 = vld [vmem:[%s5 + $0xb0] sm:$0xff]
        %v2293 = vld [vmem:[%s5 + $0xb8] sm:$0xff]
        %v2294 = vld [vmem:[%s5 + $0xc0] sm:$0xff]
        %v2295 = vld [vmem:[%s5 + $0xc8] sm:$0xff]
        %v2296 = vld [vmem:[%s5 + $0xd0] sm:$0xff]
        %v2297 = vld [vmem:[%s5 + $0xd8] sm:$0xff]
        %v2298 = vld [vmem:[%s5 + $0xe0] sm:$0xff]
        %v2299 = vld [vmem:[%s5 + $0xe8] sm:$0xff]
        %v2300 = vld [vmem:[%s5 + $0xf0] sm:$0xff]
        %v2301 = vld [vmem:[%s5 + $0xf8] sm:$0xff]
        %v2302 = vpack.c.bf16 %v2206, %v2206
        %v2303 = vpack.c.bf16 %v2227, %v2227
        %v2304 = vpack.c.bf16 %v2248, %v2248
        %v2305 = vpack.c.bf16 %v2269, %v2269
        %v2306 = vld [vmem:[%s5 + $0x100] sm:$0xff]
        %v2307 = vld [vmem:[%s5 + $0x108] sm:$0xff]
        %v2308 = vld [vmem:[%s5 + $0x110] sm:$0xff]
        %v2309 = vld [vmem:[%s5 + $0x118] sm:$0xff]
        %v2310 = vld [vmem:[%s5 + $0x120] sm:$0xff]
        %v2311 = vld [vmem:[%s5 + $0x128] sm:$0xff]
        %v2312 = vld [vmem:[%s5 + $0x130] sm:$0xff]
        %v2313 = vld [vmem:[%s5 + $0x138] sm:$0xff]
        %v2314 = vld [vmem:[%s5 + $0x140] sm:$0xff]
        %v2315 = vld [vmem:[%s5 + $0x148] sm:$0xff]
        %v2316 = vld [vmem:[%s5 + $0x150] sm:$0xff]
        %v2317 = vld [vmem:[%s5 + $0x158] sm:$0xff]
        %v2318 = vld [vmem:[%s5 + $0x160] sm:$0xff]
        %v2319 = vld [vmem:[%s5 + $0x168] sm:$0xff]
        %v2320 = vld [vmem:[%s5 + $0x170] sm:$0xff]
        %v2321 = vld [vmem:[%s5 + $0x178] sm:$0xff]
        %v2322 = vpack.c.bf16 %v2164, %v2164
        %v2323 = vpack.c.bf16 %v2185, %v2185
        %v2326 = vunpack.c.l.b16 %v2322
        %v2327 = vunpack.c.l.b16 %v2323
        %vm2328 = vcmask 1041409
        %v2329 = vsel %vm2328, %v2327, %v2326
        %v2330 = vpack.c.b16 %v2329, %v2329
        %v2348 = vunpack.c.l.b16 %v2306
        %v2349 = vunpack.c.h.b16 %v2306
        %v2350 = vunpack.c.l.b16 %v2307
        %v2351 = vunpack.c.h.b16 %v2307
        %v2352 = vunpack.c.l.b16 %v2308
        %v2353 = vunpack.c.h.b16 %v2308
        %v2354 = vunpack.c.l.b16 %v2309
        %v2355 = vunpack.c.h.b16 %v2309
        %v2356 = vunpack.c.l.b16 %v2310
        %v2357 = vunpack.c.h.b16 %v2310
        %v2358 = vunpack.c.l.b16 %v2311
        %v2359 = vunpack.c.h.b16 %v2311
        %v2360 = vunpack.c.l.b16 %v2312
        %v2361 = vunpack.c.h.b16 %v2312
        %v2362 = vunpack.c.l.b16 %v2313
        %v2363 = vunpack.c.h.b16 %v2313
        %v2364 = vunpack.c.l.b16 %v2314
        %v2365 = vunpack.c.h.b16 %v2314
        %v2366 = vunpack.c.l.b16 %v2315
        %v2367 = vunpack.c.h.b16 %v2315
        %v2368 = vunpack.c.l.b16 %v2316
        %v2369 = vunpack.c.h.b16 %v2316
        %v2370 = vunpack.c.l.b16 %v2317
        %v2371 = vunpack.c.h.b16 %v2317
        %v2372 = vunpack.c.l.b16 %v2318
        %v2373 = vunpack.c.h.b16 %v2318
        %v2374 = vunpack.c.l.b16 %v2319
        %v2375 = vunpack.c.h.b16 %v2319
        %v2376 = vunpack.c.l.b16 %v2320
        %v2377 = vunpack.c.h.b16 %v2320
        %v2378 = vunpack.c.l.b16 %v2321
        %v2379 = vunpack.c.h.b16 %v2321
        %v2380 = vpack.c.b16 %v2350, %v2348
        %v2381 = vpack.c.b16 %v2351, %v2349
        %v2382 = vpack.c.b16 %v2354, %v2352
        %v2383 = vpack.c.b16 %v2355, %v2353
        %v2384 = vpack.c.b16 %v2358, %v2356
        %v2385 = vpack.c.b16 %v2359, %v2357
        %v2386 = vpack.c.b16 %v2362, %v2360
        %v2387 = vpack.c.b16 %v2363, %v2361
        %v2388 = vpack.c.b16 %v2366, %v2364
        %v2389 = vpack.c.b16 %v2367, %v2365
        %v2390 = vpack.c.b16 %v2370, %v2368
        %v2391 = vpack.c.b16 %v2371, %v2369
        %v2392 = vpack.c.b16 %v2374, %v2372
        %v2393 = vpack.c.b16 %v2375, %v2373
        %v2394 = vpack.c.b16 %v2378, %v2376
        %v2395 = vpack.c.b16 %v2379, %v2377
        %2412 = vmatprep.subr.bf16.mxu0 %v2395
        %2413 = vmatpush1.bf16.msra.mxu0 %v2394
        %2414 = vmatprep.subr.bf16.mxu0 %v2393
        %2415 = vmatpush1.bf16.msra.mxu0 %v2392
        %2416 = vmatprep.subr.bf16.mxu0 %v2391
        %2417 = vmatpush1.bf16.msra.mxu0 %v2390
        %2418 = vmatprep.subr.bf16.mxu0 %v2389
        %2419 = vmatpush1.bf16.msra.mxu0 %v2388
        %2420 = vmatprep.subr.bf16.mxu0 %v2387
        %2421 = vmatpush1.bf16.msra.mxu0 %v2386
        %2422 = vmatprep.subr.bf16.mxu0 %v2385
        %2423 = vmatpush1.bf16.msra.mxu0 %v2384
        %2424 = vmatprep.subr.bf16.mxu0 %v2383
        %2425 = vmatpush1.bf16.msra.mxu0 %v2382
        %2426 = vmatprep.subr.bf16.mxu0 %v2381
        %2427 = vmatpush1.bf16.msra.mxu0 %v2380
        %2428 = vmatprep.subr.bf16.mxu0 0
        %2429 = vmatpush2.bf16.msra.mxu0 0
        %2430 = vmatprep.subr.bf16.mxu0 0
        %2431 = vmatpush2.bf16.msra.mxu0 0
        %2432 = vmatprep.subr.bf16.mxu0 0
        %2433 = vmatpush2.bf16.msra.mxu0 0
        %2434 = vmatprep.subr.bf16.mxu0 0
        %2435 = vmatpush2.bf16.msra.mxu0 0
        %2436 = vmatprep.subr.bf16.mxu0 0
        %2437 = vmatpush2.bf16.msra.mxu0 0
        %2438 = vmatprep.subr.bf16.mxu0 0
        %2439 = vmatpush2.bf16.msra.mxu0 0
        %2440 = vmatprep.subr.bf16.mxu0 0
        %2441 = vmatpush2.bf16.msra.mxu0 0
        %2442 = vmatprep.subr.bf16.mxu0 0
        %2443 = vmatpush2.bf16.msra.mxu0 0
        %2444 = vmatprep.mubr.bf16.mxu0 0
        %2445 = vmatmul.mubr.bf16.gmra.mxu0 %v2330
        %v2446 = vpop.f32.mrf.mxu0
        %v2447 = vadd.f32 0.0, %v2446
        %v2448 = vpop.f32.mrf.mxu0
        %v2449 = vadd.f32 0.0, %v2448
        %v2450 = vpop.f32.mrf.mxu0
        %v2451 = vpop.f32.mrf.mxu0
        %2452 = vdwg.mxu0
        %v2457 = vunpack.c.l.b16 %v2302
        %v2458 = vunpack.c.l.b16 %v2303
        %v2459 = vunpack.c.l.b16 %v2304
        %v2460 = vunpack.c.l.b16 %v2305
        %v2461 = vsel %vm2328, %v2459, %v2457
        %v2462 = vsel %vm2328, %v2460, %v2458
        %v2463 = vpack.c.b16 %v2461, %v2461
        %v2464 = vpack.c.b16 %v2462, %v2462
        %v2499 = vunpack.c.l.b16 %v2270
        %v2500 = vunpack.c.h.b16 %v2270
        %v2501 = vunpack.c.l.b16 %v2271
        %v2502 = vunpack.c.h.b16 %v2271
        %v2503 = vunpack.c.l.b16 %v2272
        %v2504 = vunpack.c.h.b16 %v2272
        %v2505 = vunpack.c.l.b16 %v2273
        %v2506 = vunpack.c.h.b16 %v2273
        %v2507 = vunpack.c.l.b16 %v2274
        %v2508 = vunpack.c.h.b16 %v2274
        %v2509 = vunpack.c.l.b16 %v2275
        %v2510 = vunpack.c.h.b16 %v2275
        %v2511 = vunpack.c.l.b16 %v2276
        %v2512 = vunpack.c.h.b16 %v2276
        %v2513 = vunpack.c.l.b16 %v2277
        %v2514 = vunpack.c.h.b16 %v2277
        %v2515 = vunpack.c.l.b16 %v2278
        %v2516 = vunpack.c.h.b16 %v2278
        %v2517 = vunpack.c.l.b16 %v2279
        %v2518 = vunpack.c.h.b16 %v2279
        %v2519 = vunpack.c.l.b16 %v2280
        %v2520 = vunpack.c.h.b16 %v2280
        %v2521 = vunpack.c.l.b16 %v2281
        %v2522 = vunpack.c.h.b16 %v2281
        %v2523 = vunpack.c.l.b16 %v2282
        %v2524 = vunpack.c.h.b16 %v2282
        %v2525 = vunpack.c.l.b16 %v2283
        %v2526 = vunpack.c.h.b16 %v2283
        %v2527 = vunpack.c.l.b16 %v2284
        %v2528 = vunpack.c.h.b16 %v2284
        %v2529 = vunpack.c.l.b16 %v2285
        %v2530 = vunpack.c.h.b16 %v2285
        %v2531 = vunpack.c.l.b16 %v2286
        %v2532 = vunpack.c.h.b16 %v2286
        %v2533 = vunpack.c.l.b16 %v2287
        %v2534 = vunpack.c.h.b16 %v2287
        %v2535 = vunpack.c.l.b16 %v2288
        %v2536 = vunpack.c.h.b16 %v2288
        %v2537 = vunpack.c.l.b16 %v2289
        %v2538 = vunpack.c.h.b16 %v2289
        %v2539 = vunpack.c.l.b16 %v2290
        %v2540 = vunpack.c.h.b16 %v2290
        %v2541 = vunpack.c.l.b16 %v2291
        %v2542 = vunpack.c.h.b16 %v2291
        %v2543 = vunpack.c.l.b16 %v2292
        %v2544 = vunpack.c.h.b16 %v2292
        %v2545 = vunpack.c.l.b16 %v2293
        %v2546 = vunpack.c.h.b16 %v2293
        %v2547 = vunpack.c.l.b16 %v2294
        %v2548 = vunpack.c.h.b16 %v2294
        %v2549 = vunpack.c.l.b16 %v2295
        %v2550 = vunpack.c.h.b16 %v2295
        %v2551 = vunpack.c.l.b16 %v2296
        %v2552 = vunpack.c.h.b16 %v2296
        %v2553 = vunpack.c.l.b16 %v2297
        %v2554 = vunpack.c.h.b16 %v2297
        %v2555 = vunpack.c.l.b16 %v2298
        %v2556 = vunpack.c.h.b16 %v2298
        %v2557 = vunpack.c.l.b16 %v2299
        %v2558 = vunpack.c.h.b16 %v2299
        %v2559 = vunpack.c.l.b16 %v2300
        %v2560 = vunpack.c.h.b16 %v2300
        %v2561 = vunpack.c.l.b16 %v2301
        %v2562 = vunpack.c.h.b16 %v2301
        %v2563 = vpack.c.b16 %v2501, %v2499
        %v2564 = vpack.c.b16 %v2502, %v2500
        %v2565 = vpack.c.b16 %v2505, %v2503
        %v2566 = vpack.c.b16 %v2506, %v2504
        %v2567 = vpack.c.b16 %v2509, %v2507
        %v2568 = vpack.c.b16 %v2510, %v2508
        %v2569 = vpack.c.b16 %v2513, %v2511
        %v2570 = vpack.c.b16 %v2514, %v2512
        %v2571 = vpack.c.b16 %v2517, %v2515
        %v2572 = vpack.c.b16 %v2518, %v2516
        %v2573 = vpack.c.b16 %v2521, %v2519
        %v2574 = vpack.c.b16 %v2522, %v2520
        %v2575 = vpack.c.b16 %v2525, %v2523
        %v2576 = vpack.c.b16 %v2526, %v2524
        %v2577 = vpack.c.b16 %v2529, %v2527
        %v2578 = vpack.c.b16 %v2530, %v2528
        %v2579 = vpack.c.b16 %v2533, %v2531
        %v2580 = vpack.c.b16 %v2534, %v2532
        %v2581 = vpack.c.b16 %v2537, %v2535
        %v2582 = vpack.c.b16 %v2538, %v2536
        %v2583 = vpack.c.b16 %v2541, %v2539
        %v2584 = vpack.c.b16 %v2542, %v2540
        %v2585 = vpack.c.b16 %v2545, %v2543
        %v2586 = vpack.c.b16 %v2546, %v2544
        %v2587 = vpack.c.b16 %v2549, %v2547
        %v2588 = vpack.c.b16 %v2550, %v2548
        %v2589 = vpack.c.b16 %v2553, %v2551
        %v2590 = vpack.c.b16 %v2554, %v2552
        %v2591 = vpack.c.b16 %v2557, %v2555
        %v2592 = vpack.c.b16 %v2558, %v2556
        %v2593 = vpack.c.b16 %v2561, %v2559
        %v2594 = vpack.c.b16 %v2562, %v2560
        %2627 = vmatprep.subr.bf16.mxu0 %v2578
        %2628 = vmatpush1.bf16.msra.mxu0 %v2577
        %2629 = vmatprep.subr.bf16.mxu0 %v2576
        %2630 = vmatpush1.bf16.msra.mxu0 %v2575
        %2631 = vmatprep.subr.bf16.mxu0 %v2574
        %2632 = vmatpush1.bf16.msra.mxu0 %v2573
        %2633 = vmatprep.subr.bf16.mxu0 %v2572
        %2634 = vmatpush1.bf16.msra.mxu0 %v2571
        %2635 = vmatprep.subr.bf16.mxu0 %v2570
        %2636 = vmatpush1.bf16.msra.mxu0 %v2569
        %2637 = vmatprep.subr.bf16.mxu0 %v2568
        %2638 = vmatpush1.bf16.msra.mxu0 %v2567
        %2639 = vmatprep.subr.bf16.mxu0 %v2566
        %2640 = vmatpush1.bf16.msra.mxu0 %v2565
        %2641 = vmatprep.subr.bf16.mxu0 %v2564
        %2642 = vmatpush1.bf16.msra.mxu0 %v2563
        %2643 = vmatprep.subr.bf16.mxu0 %v2594
        %2644 = vmatpush2.bf16.msra.mxu0 %v2593
        %2645 = vmatprep.subr.bf16.mxu0 %v2592
        %2646 = vmatpush2.bf16.msra.mxu0 %v2591
        %2647 = vmatprep.subr.bf16.mxu0 %v2590
        %2648 = vmatpush2.bf16.msra.mxu0 %v2589
        %2649 = vmatprep.subr.bf16.mxu0 %v2588
        %2650 = vmatpush2.bf16.msra.mxu0 %v2587
        %2651 = vmatprep.subr.bf16.mxu0 %v2586
        %2652 = vmatpush2.bf16.msra.mxu0 %v2585
        %2653 = vmatprep.subr.bf16.mxu0 %v2584
        %2654 = vmatpush2.bf16.msra.mxu0 %v2583
        %2655 = vmatprep.subr.bf16.mxu0 %v2582
        %2656 = vmatpush2.bf16.msra.mxu0 %v2581
        %2657 = vmatprep.subr.bf16.mxu0 %v2580
        %2658 = vmatpush2.bf16.msra.mxu0 %v2579
        %2659 = vmatprep.mubr.bf16.mxu0 %v2464
        %2660 = vmatmul.mubr.bf16.gmra.mxu0 %v2463
        %v2661 = vpop.f32.mrf.mxu0
        %v2662 = vadd.f32 %v2447, %v2661
        %v2663 = vpop.f32.mrf.mxu0
        %v2664 = vadd.f32 %v2449, %v2663
        %v2665 = vpop.f32.mrf.mxu0
        %v2666 = vpop.f32.mrf.mxu0
        %2667 = vdwg.mxu0
        %v2668 = vld [vmem:[%s5 + $0x180] sm:$0xff]
        %v2669 = vld [vmem:[%s5 + $0x188] sm:$0xff]
        %v2670 = vld [vmem:[%s5 + $0x190] sm:$0xff]
        %v2671 = vld [vmem:[%s5 + $0x198] sm:$0xff]
        %v2672 = vld [vmem:[%s5 + $0x1a0] sm:$0xff]
        %v2673 = vld [vmem:[%s5 + $0x1a8] sm:$0xff]
        %v2674 = vld [vmem:[%s5 + $0x1b0] sm:$0xff]
        %v2675 = vld [vmem:[%s5 + $0x1b8] sm:$0xff]
        %v2676 = vpack.c.bf16 %v2106, %v2106
        %v2677 = vpack.c.bf16 %v2143, %v2143
        %v2680 = vunpack.c.l.b16 %v2676
        %v2681 = vunpack.c.l.b16 %v2677
        %v2682 = vsel %vm2328, %v2681, %v2680
        %v2683 = vpack.c.b16 %v2682, %v2682
        %v2692 = vunpack.c.l.b16 %v2668
        %v2693 = vunpack.c.h.b16 %v2668
        %v2694 = vunpack.c.l.b16 %v2669
        %v2695 = vunpack.c.h.b16 %v2669
        %v2696 = vunpack.c.l.b16 %v2670
        %v2697 = vunpack.c.h.b16 %v2670
        %v2698 = vunpack.c.l.b16 %v2671
        %v2699 = vunpack.c.h.b16 %v2671
        %v2700 = vunpack.c.l.b16 %v2672
        %v2701 = vunpack.c.h.b16 %v2672
        %v2702 = vunpack.c.l.b16 %v2673
        %v2703 = vunpack.c.h.b16 %v2673
        %v2704 = vunpack.c.l.b16 %v2674
        %v2705 = vunpack.c.h.b16 %v2674
        %v2706 = vunpack.c.l.b16 %v2675
        %v2707 = vunpack.c.h.b16 %v2675
        %v2708 = vpack.c.b16 %v2694, %v2692
        %v2709 = vpack.c.b16 %v2695, %v2693
        %v2710 = vpack.c.b16 %v2698, %v2696
        %v2711 = vpack.c.b16 %v2699, %v2697
        %v2712 = vpack.c.b16 %v2702, %v2700
        %v2713 = vpack.c.b16 %v2703, %v2701
        %v2714 = vpack.c.b16 %v2706, %v2704
        %v2715 = vpack.c.b16 %v2707, %v2705
        %v2725 = vsel %vm1159, %v2683, 0
        %2727 = vmatprep.subr.bf16.mxu0 0
        %2728 = vmatpush1.bf16.msra.mxu0 0
        %2729 = vmatprep.subr.bf16.mxu0 0
        %2730 = vmatpush1.bf16.msra.mxu0 0
        %2731 = vmatprep.subr.bf16.mxu0 0
        %2732 = vmatpush1.bf16.msra.mxu0 0
        %2733 = vmatprep.subr.bf16.mxu0 0
        %2734 = vmatpush1.bf16.msra.mxu0 0
        %2735 = vmatprep.subr.bf16.mxu0 %v2715
        %2736 = vmatpush1.bf16.msra.mxu0 %v2714
        %2737 = vmatprep.subr.bf16.mxu0 %v2713
        %2738 = vmatpush1.bf16.msra.mxu0 %v2712
        %2739 = vmatprep.subr.bf16.mxu0 %v2711
        %2740 = vmatpush1.bf16.msra.mxu0 %v2710
        %2741 = vmatprep.subr.bf16.mxu0 %v2709
        %2742 = vmatpush1.bf16.msra.mxu0 %v2708
        %2743 = vmatprep.subr.bf16.mxu0 0
        %2744 = vmatpush2.bf16.msra.mxu0 0
        %2745 = vmatprep.subr.bf16.mxu0 0
        %2746 = vmatpush2.bf16.msra.mxu0 0
        %2747 = vmatprep.subr.bf16.mxu0 0
        %2748 = vmatpush2.bf16.msra.mxu0 0
        %2749 = vmatprep.subr.bf16.mxu0 0
        %2750 = vmatpush2.bf16.msra.mxu0 0
        %2751 = vmatprep.subr.bf16.mxu0 0
        %2752 = vmatpush2.bf16.msra.mxu0 0
        %2753 = vmatprep.subr.bf16.mxu0 0
        %2754 = vmatpush2.bf16.msra.mxu0 0
        %2755 = vmatprep.subr.bf16.mxu0 0
        %2756 = vmatpush2.bf16.msra.mxu0 0
        %2757 = vmatprep.subr.bf16.mxu0 0
        %2758 = vmatpush2.bf16.msra.mxu0 0
        %2759 = vmatprep.mubr.bf16.mxu0 0
        %2760 = vmatmul.mubr.bf16.gmra.mxu0 %v2725
        %v2761 = vpop.f32.mrf.mxu0
        %v2762 = vadd.f32 0.0, %v2761
        %v2763 = vpop.f32.mrf.mxu0
        %v2764 = vadd.f32 0.0, %v2763
        %v2765 = vpop.f32.mrf.mxu0
        %v2766 = vpop.f32.mrf.mxu0
        %2767 = vdwg.mxu0
        %v2768 = vadd.f32 %v2662, %v2762
        %v2769 = vadd.f32 %v2664, %v2764
        %v2771 = vlaneseq
        %v2772 = vshrl.u32 %v2771, 7
        %v2773 = vsub.s32 0, %v2772
        %v2774 = vrot.slane %v422, %v2773
        %v2775 = vlaneseq
        %v2776 = vshrl.u32 %v2775, 7
        %v2777 = vsub.s32 1, %v2776
        %v2778 = vrot.slane %v422, %v2777
        %v2781 = vadd.f32 %v2768, %v2774
        %v2782 = vadd.f32 %v2769, %v2778
        %v2783 = vmax.f32 %v2781, 0.0
        %v2784 = vmax.f32 %v2782, 0.0
        %v2785 = vld [vmem:[#allocation7] sm:$0xf]
        %v2786 = vld [vmem:[#allocation7 + $0x4] sm:$0xf]
        %v2787 = vld [vmem:[#allocation7 + $0x8] sm:$0xf]
        %v2788 = vld [vmem:[#allocation7 + $0xc] sm:$0xf]
        %v2789 = vld [vmem:[#allocation7 + $0x10] sm:$0xf]
        %v2790 = vld [vmem:[#allocation7 + $0x14] sm:$0xf]
        %v2791 = vld [vmem:[#allocation7 + $0x18] sm:$0xf]
        %v2792 = vld [vmem:[#allocation7 + $0x1c] sm:$0xf]
        %v2793 = vld [vmem:[#allocation7 + $0x20] sm:$0xf]
        %v2794 = vld [vmem:[#allocation7 + $0x24] sm:$0xf]
        %v2795 = vld [vmem:[#allocation7 + $0x28] sm:$0xf]
        %v2796 = vld [vmem:[#allocation7 + $0x2c] sm:$0xf]
        %v2797 = vld [vmem:[#allocation7 + $0x30] sm:$0xf]
        %v2798 = vld [vmem:[#allocation7 + $0x34] sm:$0xf]
        %v2799 = vld [vmem:[#allocation7 + $0x38] sm:$0xf]
        %v2800 = vld [vmem:[#allocation7 + $0x3c] sm:$0xf]
        %v2801 = vld [vmem:[#allocation7 + $0x40] sm:$0xf]
        %v2802 = vld [vmem:[#allocation7 + $0x44] sm:$0xf]
        %v2803 = vld [vmem:[#allocation7 + $0x48] sm:$0xf]
        %v2804 = vld [vmem:[#allocation7 + $0x4c] sm:$0xf]
        %v2805 = vld [vmem:[#allocation7 + $0x50] sm:$0xf]
        %v2806 = vld [vmem:[#allocation7 + $0x54] sm:$0xf]
        %v2807 = vld [vmem:[#allocation7 + $0x58] sm:$0xf]
        %v2808 = vld [vmem:[#allocation7 + $0x5c] sm:$0xf]
        %v2809 = vld [vmem:[#allocation7 + $0x60] sm:$0xf]
        %v2810 = vld [vmem:[#allocation7 + $0x64] sm:$0xf]
        %v2811 = vld [vmem:[#allocation7 + $0x68] sm:$0xf]
        %v2812 = vld [vmem:[#allocation7 + $0x6c] sm:$0xf]
        %v2813 = vld [vmem:[#allocation7 + $0x70] sm:$0xf]
        %v2814 = vld [vmem:[#allocation7 + $0x74] sm:$0xf]
        %v2815 = vld [vmem:[#allocation7 + $0x78] sm:$0xf]
        %v2816 = vld [vmem:[#allocation7 + $0x7c] sm:$0xf]
        %v2817 = vpack.c.bf16 %v2783, %v2783
        %v2818 = vpack.c.bf16 %v2784, %v2784
        %v2851 = vunpack.c.l.b16 %v2785
        %v2852 = vunpack.c.l.b16 %v2786
        %v2853 = vunpack.c.l.b16 %v2787
        %v2854 = vunpack.c.l.b16 %v2788
        %v2855 = vunpack.c.l.b16 %v2789
        %v2856 = vunpack.c.l.b16 %v2790
        %v2857 = vunpack.c.l.b16 %v2791
        %v2858 = vunpack.c.l.b16 %v2792
        %v2859 = vunpack.c.l.b16 %v2793
        %v2860 = vunpack.c.l.b16 %v2794
        %v2861 = vunpack.c.l.b16 %v2795
        %v2862 = vunpack.c.l.b16 %v2796
        %v2863 = vunpack.c.l.b16 %v2797
        %v2864 = vunpack.c.l.b16 %v2798
        %v2865 = vunpack.c.l.b16 %v2799
        %v2866 = vunpack.c.l.b16 %v2800
        %v2867 = vunpack.c.l.b16 %v2801
        %v2868 = vunpack.c.l.b16 %v2802
        %v2869 = vunpack.c.l.b16 %v2803
        %v2870 = vunpack.c.l.b16 %v2804
        %v2871 = vunpack.c.l.b16 %v2805
        %v2872 = vunpack.c.l.b16 %v2806
        %v2873 = vunpack.c.l.b16 %v2807
        %v2874 = vunpack.c.l.b16 %v2808
        %v2875 = vunpack.c.l.b16 %v2809
        %v2876 = vunpack.c.l.b16 %v2810
        %v2877 = vunpack.c.l.b16 %v2811
        %v2878 = vunpack.c.l.b16 %v2812
        %v2879 = vunpack.c.l.b16 %v2813
        %v2880 = vunpack.c.l.b16 %v2814
        %v2881 = vunpack.c.l.b16 %v2815
        %v2882 = vunpack.c.l.b16 %v2816
        %v2883 = vpack.c.b16 %v2852, %v2851
        %v2884 = vpack.c.b16 %v2854, %v2853
        %v2885 = vpack.c.b16 %v2856, %v2855
        %v2886 = vpack.c.b16 %v2858, %v2857
        %v2887 = vpack.c.b16 %v2860, %v2859
        %v2888 = vpack.c.b16 %v2862, %v2861
        %v2889 = vpack.c.b16 %v2864, %v2863
        %v2890 = vpack.c.b16 %v2866, %v2865
        %v2891 = vpack.c.b16 %v2868, %v2867
        %v2892 = vpack.c.b16 %v2870, %v2869
        %v2893 = vpack.c.b16 %v2872, %v2871
        %v2894 = vpack.c.b16 %v2874, %v2873
        %v2895 = vpack.c.b16 %v2876, %v2875
        %v2896 = vpack.c.b16 %v2878, %v2877
        %v2897 = vpack.c.b16 %v2880, %v2879
        %v2898 = vpack.c.b16 %v2882, %v2881
        %2915 = vmatprep.subr.bf16.mxu0 0
        %2916 = vmatpush1.bf16.msra.mxu0 %v2890
        %2917 = vmatprep.subr.bf16.mxu0 0
        %2918 = vmatpush1.bf16.msra.mxu0 %v2889
        %2919 = vmatprep.subr.bf16.mxu0 0
        %2920 = vmatpush1.bf16.msra.mxu0 %v2888
        %2921 = vmatprep.subr.bf16.mxu0 0
        %2922 = vmatpush1.bf16.msra.mxu0 %v2887
        %2923 = vmatprep.subr.bf16.mxu0 0
        %2924 = vmatpush1.bf16.msra.mxu0 %v2886
        %2925 = vmatprep.subr.bf16.mxu0 0
        %2926 = vmatpush1.bf16.msra.mxu0 %v2885
        %2927 = vmatprep.subr.bf16.mxu0 0
        %2928 = vmatpush1.bf16.msra.mxu0 %v2884
        %2929 = vmatprep.subr.bf16.mxu0 0
        %2930 = vmatpush1.bf16.msra.mxu0 %v2883
        %2931 = vmatprep.subr.bf16.mxu0 0
        %2932 = vmatpush2.bf16.msra.mxu0 %v2898
        %2933 = vmatprep.subr.bf16.mxu0 0
        %2934 = vmatpush2.bf16.msra.mxu0 %v2897
        %2935 = vmatprep.subr.bf16.mxu0 0
        %2936 = vmatpush2.bf16.msra.mxu0 %v2896
        %2937 = vmatprep.subr.bf16.mxu0 0
        %2938 = vmatpush2.bf16.msra.mxu0 %v2895
        %2939 = vmatprep.subr.bf16.mxu0 0
        %2940 = vmatpush2.bf16.msra.mxu0 %v2894
        %2941 = vmatprep.subr.bf16.mxu0 0
        %2942 = vmatpush2.bf16.msra.mxu0 %v2893
        %2943 = vmatprep.subr.bf16.mxu0 0
        %2944 = vmatpush2.bf16.msra.mxu0 %v2892
        %2945 = vmatprep.subr.bf16.mxu0 0
        %2946 = vmatpush2.bf16.msra.mxu0 %v2891
        %2947 = vmatprep.mubr.bf16.mxu0 %v2818
        %2948 = vmatmul.mubr.bf16.gmra.mxu0 %v2817
        %v2949 = vpop.f32.mrf.mxu0
        %v2950 = vadd.f32 %v423, %v2949
        %v2951 = vpop.f32.mrf.mxu0
        %v2952 = vpop.f32.mrf.mxu0
        %v2953 = vpop.f32.mrf.mxu0
        %2954 = vdwg.mxu0
        %v2955 = vmax.f32 %v2950, 0.0
        %v2956 = vld [vmem:[%s7] sm:$0xf]
        %v2957 = vld [vmem:[%s7 + $0x4] sm:$0xf]
        %v2958 = vld [vmem:[%s7 + $0x8] sm:$0xf]
        %v2959 = vld [vmem:[%s7 + $0xc] sm:$0xf]
        %v2960 = vld [vmem:[%s7 + $0x10] sm:$0xf]
        %v2961 = vld [vmem:[%s7 + $0x14] sm:$0xf]
        %v2962 = vld [vmem:[%s7 + $0x18] sm:$0xf]
        %v2963 = vld [vmem:[%s7 + $0x1c] sm:$0xf]
        %v2964 = vld [vmem:[%s7 + $0x20] sm:$0xf]
        %v2965 = vld [vmem:[%s7 + $0x24] sm:$0xf]
        %v2966 = vld [vmem:[%s7 + $0x28] sm:$0xf]
        %v2967 = vld [vmem:[%s7 + $0x2c] sm:$0xf]
        %v2968 = vld [vmem:[%s7 + $0x30] sm:$0xf]
        %v2969 = vld [vmem:[%s7 + $0x34] sm:$0xf]
        %v2970 = vld [vmem:[%s7 + $0x38] sm:$0xf]
        %v2971 = vld [vmem:[%s7 + $0x3c] sm:$0xf]
        %v2972 = vpack.c.bf16 %v2955, %v2955
        %v2989 = vunpack.c.l.b16 %v2956
        %v2990 = vunpack.c.l.b16 %v2957
        %v2991 = vunpack.c.l.b16 %v2958
        %v2992 = vunpack.c.l.b16 %v2959
        %v2993 = vunpack.c.l.b16 %v2960
        %v2994 = vunpack.c.l.b16 %v2961
        %v2995 = vunpack.c.l.b16 %v2962
        %v2996 = vunpack.c.l.b16 %v2963
        %v2997 = vunpack.c.l.b16 %v2964
        %v2998 = vunpack.c.l.b16 %v2965
        %v2999 = vunpack.c.l.b16 %v2966
        %v3000 = vunpack.c.l.b16 %v2967
        %v3001 = vunpack.c.l.b16 %v2968
        %v3002 = vunpack.c.l.b16 %v2969
        %v3003 = vunpack.c.l.b16 %v2970
        %v3004 = vunpack.c.l.b16 %v2971
        %v3005 = vpack.c.b16 %v2990, %v2989
        %v3006 = vpack.c.b16 %v2992, %v2991
        %v3007 = vpack.c.b16 %v2994, %v2993
        %v3008 = vpack.c.b16 %v2996, %v2995
        %v3009 = vpack.c.b16 %v2998, %v2997
        %v3010 = vpack.c.b16 %v3000, %v2999
        %v3011 = vpack.c.b16 %v3002, %v3001
        %v3012 = vpack.c.b16 %v3004, %v3003
        %3021 = vmatprep.subr.bf16.mxu0 0
        %3022 = vmatpush1.bf16.msra.mxu0 %v3012
        %3023 = vmatprep.subr.bf16.mxu0 0
        %3024 = vmatpush1.bf16.msra.mxu0 %v3011
        %3025 = vmatprep.subr.bf16.mxu0 0
        %3026 = vmatpush1.bf16.msra.mxu0 %v3010
        %3027 = vmatprep.subr.bf16.mxu0 0
        %3028 = vmatpush1.bf16.msra.mxu0 %v3009
        %3029 = vmatprep.subr.bf16.mxu0 0
        %3030 = vmatpush1.bf16.msra.mxu0 %v3008
        %3031 = vmatprep.subr.bf16.mxu0 0
        %3032 = vmatpush1.bf16.msra.mxu0 %v3007
        %3033 = vmatprep.subr.bf16.mxu0 0
        %3034 = vmatpush1.bf16.msra.mxu0 %v3006
        %3035 = vmatprep.subr.bf16.mxu0 0
        %3036 = vmatpush1.bf16.msra.mxu0 %v3005
        %3037 = vmatprep.subr.bf16.mxu0 0
        %3038 = vmatpush2.bf16.msra.mxu0 0
        %3039 = vmatprep.subr.bf16.mxu0 0
        %3040 = vmatpush2.bf16.msra.mxu0 0
        %3041 = vmatprep.subr.bf16.mxu0 0
        %3042 = vmatpush2.bf16.msra.mxu0 0
        %3043 = vmatprep.subr.bf16.mxu0 0
        %3044 = vmatpush2.bf16.msra.mxu0 0
        %3045 = vmatprep.subr.bf16.mxu0 0
        %3046 = vmatpush2.bf16.msra.mxu0 0
        %3047 = vmatprep.subr.bf16.mxu0 0
        %3048 = vmatpush2.bf16.msra.mxu0 0
        %3049 = vmatprep.subr.bf16.mxu0 0
        %3050 = vmatpush2.bf16.msra.mxu0 0
        %3051 = vmatprep.subr.bf16.mxu0 0
        %3052 = vmatpush2.bf16.msra.mxu0 0
        %3053 = vmatprep.mubr.bf16.mxu0 0
        %3054 = vmatmul.mubr.bf16.gmra.mxu0 %v2972
        %v3055 = vpop.f32.mrf.mxu0
        %v3056 = vadd.f32 %v424, %v3055
        %v3057 = vpop.f32.mrf.mxu0
        %v3058 = vpop.f32.mrf.mxu0
        %v3059 = vpop.f32.mrf.mxu0
        %3060 = vdwg.mxu0
        %v3061 = vmax.f32 %v3056, 0.0
        %v3062 = vld [vmem:[%s8] sm:$0x1]
        %v3063 = vpack.c.bf16 %v3061, %v3061
        %3065 = vset.pattern.permute.xlu0 0
        %3066 = vperm.xlu0 %3065, %v425
        %v3067 = vpop.permute.xlu0 %3066
        %vm3069 = vcmask 130048
        %v3071 = vsel %vm3069, %v3062, 0
        %v3074 = vsel %vm3069, %v3063, 0
        %3076 = vmatprep.subr.bf16.mxu0 0
        %3077 = vmatpush1.bf16.xpose.msra.mxu0 0
        %3078 = vmatprep.subr.bf16.mxu0 0
        %3079 = vmatpush1.bf16.xpose.msra.mxu0 0
        %3080 = vmatprep.subr.bf16.mxu0 0
        %3081 = vmatpush1.bf16.xpose.msra.mxu0 0
        %3082 = vmatprep.subr.bf16.mxu0 0
        %3083 = vmatpush1.bf16.xpose.msra.mxu0 0
        %3084 = vmatprep.subr.bf16.mxu0 0
        %3085 = vmatpush1.bf16.xpose.msra.mxu0 0
        %3086 = vmatprep.subr.bf16.mxu0 0
        %3087 = vmatpush1.bf16.xpose.msra.mxu0 0
        %3088 = vmatprep.subr.bf16.mxu0 0
        %3089 = vmatpush1.bf16.xpose.msra.mxu0 0
        %3090 = vmatprep.subr.bf16.mxu0 0
        %3091 = vmatpush1.bf16.xpose.msra.mxu0 %v3074
        %3092 = vmatprep.subr.bf16.mxu0 0
        %3093 = vmatpush2.bf16.xpose.msra.mxu0 0
        %3094 = vmatprep.subr.bf16.mxu0 0
        %3095 = vmatpush2.bf16.xpose.msra.mxu0 0
        %3096 = vmatprep.subr.bf16.mxu0 0
        %3097 = vmatpush2.bf16.xpose.msra.mxu0 0
        %3098 = vmatprep.subr.bf16.mxu0 0
        %3099 = vmatpush2.bf16.xpose.msra.mxu0 0
        %3100 = vmatprep.subr.bf16.mxu0 0
        %3101 = vmatpush2.bf16.xpose.msra.mxu0 0
        %3102 = vmatprep.subr.bf16.mxu0 0
        %3103 = vmatpush2.bf16.xpose.msra.mxu0 0
        %3104 = vmatprep.subr.bf16.mxu0 0
        %3105 = vmatpush2.bf16.xpose.msra.mxu0 0
        %3106 = vmatprep.subr.bf16.mxu0 0
        %3107 = vmatpush2.bf16.xpose.msra.mxu0 0
        %3108 = vmatprep.mubr.bf16.mxu0 0
        %3109 = vmatmul.mubr.bf16.gmra.mxu0 %v3071
        %v3110 = vpop.f32.mrf.mxu0
        %v3111 = vadd.f32 %v3067, %v3110
        %v3112 = vpop.f32.mrf.mxu0
        %v3113 = vpop.f32.mrf.mxu0
        %v3114 = vpop.f32.mrf.mxu0
        %3115 = vdwg.mxu0
        %vm3116 = vcmask 8192
        %3117 = vst.msk [vmem:[%s414] sm:$0x1] %vm3116, %v3111
        %p3118 = scmp.lt.s32.totalorder %s24, 1
        %s3119 = scalar_select %p3118, %s24, 1
        %s3120 = scalar_lea.vmem %s10, %s3119
        // Predicated region
        $region77: #{pfdnet_forward.1} parent=59 // pred_check
          %p3121 = pneg %p257
        $region78: #{pfdnet_forward.1} parent=59 // pred_check_branch
          %3123 = sbr.rel (%p3121) target = $region80
        $region79: #{pfdnet_forward.1} parent=59 // pred_region
          _
        $region80: #{pfdnet_forward.1} parent=59 // pred_fallthru
          _
      $region60: #{pfdnet_forward.1} parent=5 // pred_fallthru
        _
      %p3124 = scmp.le.s32.totalorder 2, %s19
      // Predicated region
      $region81: #{pfdnet_forward.1} parent=5 // pred_check
        %p3125 = pneg %p3124
      $region82: #{pfdnet_forward.1} parent=5 // pred_check_branch
        %3127 = sbr.rel (%p3125) target = $region84
      $region83: #{pfdnet_forward.1} parent=5 // pred_region
        %s3128 = ssub.s32 %s19, 2
        // Predicated region
        $region85: #{pfdnet_forward.1} parent=83 // pred_check
          %p3129 = pneg %p263
        $region86: #{pfdnet_forward.1} parent=83 // pred_check_branch
          %3131 = sbr.rel (%p3129) target = $region88
        $region87: #{pfdnet_forward.1} parent=83 // pred_region
          %p3132 = scmp.lt.s32.totalorder %s25, 1
          %s3133 = scalar_select %p3132, %s25, 1
          %s3134 = scalar_lea.vmem %s10, %s3133
        $region88: #{pfdnet_forward.1} parent=83 // pred_fallthru
          _
      $region84: #{pfdnet_forward.1} parent=5 // pred_fallthru
        _
    $region6: #{pfdnet_forward.1} parent=1 // loop_footer
      %s23 = sadd.s32 1, %s19
    $region7: #{pfdnet_forward.1} parent=1 // loop_footer_branch
      %18 = sbr.rel target = $region3
    $region8: #{pfdnet_forward.1} parent=1 // loop_exit
      _
    %3135 = vsyncpa [#allocation3], 1
    %s3136 = scalar_lea.sflag [#allocation3], 1
    %3137 = vsyncpa %s3136, 1
    %3138 = vsyncpa [#allocation5], 1
    %3139 = vsyncpa [#allocation8], 1

</llo_original>
